<compile_context>
chip_gen: v7x
topology: tpu7x:2x2x1
jax: 0.10.0
libtpu: 0.0.40
codegen_flags: <defaults>
</compile_context>

<pallas_src>
import math

import jax
import jax.numpy as jnp
from jax.experimental import pallas as pl
from jax.experimental.pallas import tpu as pltpu

# ---------------------------------------------------------------------------
# Static model configuration (small, but consistent with the module:
# num_time_steps must reduce to 7 after the conv/pool stack for the fc).
# ---------------------------------------------------------------------------
INPUT_DIM = 6          # input_dim        (e.g. IMU channels)
OUT_CH = 64            # output_channels
T_STEPS = 50           # num_time_steps   (50 -> 46 -> 23 -> 19 -> 9 -> 7)
EMBED = 128            # embedding        (128 => lane-dense output stores)

K1, K2, K3 = 5, 5, 3   # conv kernel sizes along time

T1 = T_STEPS - K1 + 1            # 46
P1 = T1 // 2                     # 23
T2 = P1 - K2 + 1                 # 19
P2 = T2 // 2                     # 9
T3 = P2 - K3 + 1                 # 7
assert T3 == 7, "num_time_steps must give the 7*output_channels fc input"


# ---------------------------------------------------------------------------
# In-kernel helpers (trace to plain slice / max / dot ops)
# ---------------------------------------------------------------------------
def _conv1d_taps(h, w_packed, bias_row, k):
    """Valid 1-D cross-correlation along rows (time); channels in lanes.

    h:        (t_in, c_in) f32
    w_packed: (k*c_in, c_out); rows [i*c_in, (i+1)*c_in) are tap i, i.e. the
              PyTorch conv weight[co, ci, i, 0] lives at w_packed[i*c_in+ci, co].
    bias_row: (1, c_out)
    """
    t_in, c_in = h.shape
    t_out = t_in - k + 1
    y = None
    for i in range(k):
        part = jnp.dot(h[i:i + t_out, :],
                       w_packed[i * c_in:(i + 1) * c_in, :],
                       preferred_element_type=jnp.float32)
        y = part if y is None else y + part
    return y + bias_row


def _max_pool_time2(y):
    """MaxPool2d((2,1)) along rows (time), stride 2, floor mode.

    Pairwise max of neighbouring rows, then stride-2 row decimation expressed
    as a tiny 0/1 selection matmul (MXU is idle here and this avoids relying on
    strided / relayout-heavy vector ops).
    """
    t_in = y.shape[0]
    t_pool = t_in // 2
    m = jnp.maximum(y[0:t_in - 1, :], y[1:t_in, :])          # (t_in-1, C)
    t_m = t_in - 1
    row = jax.lax.broadcasted_iota(jnp.int32, (t_pool, t_m), 0)
    col = jax.lax.broadcasted_iota(jnp.int32, (t_pool, t_m), 1)
    sel = (col == 2 * row).astype(jnp.float32)                # picks rows 0,2,4,...
    return jnp.dot(sel, m, preferred_element_type=jnp.float32)


# ---------------------------------------------------------------------------
# Kernel: one batch sample per grid step, whole CNN + fc fused
# ---------------------------------------------------------------------------
def cnn_base_kernel(x_ref, w1_ref, w2_ref, w3_ref, bconv_ref, wfc_ref, bfc_ref,
                    o_ref):
    x = x_ref[...]                       # (T_STEPS, INPUT_DIM)
    w1 = w1_ref[...]                     # (K1*INPUT_DIM, OUT_CH)
    w2 = w2_ref[...]                     # (K2*OUT_CH,   OUT_CH)
    w3 = w3_ref[...]                     # (K3*OUT_CH,   OUT_CH)
    bconv = bconv_ref[...]               # (3, OUT_CH)   packed conv biases
    wfc = wfc_ref[...]                   # (T3*OUT_CH, EMBED)
    bfc = bfc_ref[...]                   # (1, EMBED)

    # block 1: Conv(5,1) -> MaxPool(2,1) -> ReLU
    y = _conv1d_taps(x, w1, bconv[0:1, :], K1)                # (46, OUT_CH)
    y = jnp.maximum(_max_pool_time2(y), 0.0)                  # (23, OUT_CH)

    # block 2: Conv(5,1) -> MaxPool(2,1) -> ReLU
    y = _conv1d_taps(y, w2, bconv[1:2, :], K2)                # (19, OUT_CH)
    y = jnp.maximum(_max_pool_time2(y), 0.0)                  # (9, OUT_CH)

    # block 3: Conv(3,1) -> ReLU
    y = jnp.maximum(_conv1d_taps(y, w3, bconv[2:3, :], K3), 0.0)   # (7, OUT_CH)

    # fc: Linear(7*OUT_CH, EMBED).  out = flatten(y) @ Wfc + b, accumulated as
    # 7 tap matmuls (row index of Wfc is t*OUT_CH + c).
    out = bfc
    for t in range(T3):
        out = out + jnp.dot(y[t:t + 1, :],
                            wfc[t * OUT_CH:(t + 1) * OUT_CH, :],
                            preferred_element_type=jnp.float32)
    o_ref[...] = out                     # (1, EMBED) lane-dense store


def _resident_spec(a):
    """Whole-array block, constant index map -> stays resident in VMEM."""
    ndim = a.ndim
    return pl.BlockSpec(a.shape, lambda b: (0,) * ndim)


def cnn_base_forward(x, params):
    """Pallas forward pass.  x: anything reshapable to (-1, INPUT_DIM, T_STEPS)."""
    x = x.reshape(-1, INPUT_DIM, T_STEPS).astype(jnp.float32)
    xt = jnp.transpose(x, (0, 2, 1))                 # (B, T, Cin): channels in lanes
    B = xt.shape[0]

    args = (xt, params["w1"], params["w2"], params["w3"],
            params["b_conv"], params["wfc"], params["bfc"])

    out = pl.pallas_call(
        cnn_base_kernel,
        out_shape=jax.ShapeDtypeStruct((B, 1, EMBED), jnp.float32),
        grid=(B,),                                   # batch grid; raise samples/step for large B
        in_specs=[pl.BlockSpec((None, T_STEPS, INPUT_DIM), lambda b: (b, 0, 0))]
                 + [_resident_spec(a) for a in args[1:]],
        out_specs=pl.BlockSpec((None, 1, EMBED), lambda b: (b, 0, 0)),
        compiler_params=pltpu.CompilerParams(
            dimension_semantics=("parallel",),       # v7x: shard batch over 2 TCs
            vmem_limit_bytes=32 * 1024 * 1024),
    )(*args)
    return out.reshape(B, EMBED)


# ---------------------------------------------------------------------------
# Parameter init (PyTorch-style U(-1/sqrt(fan_in), 1/sqrt(fan_in)), already in
# the packed layouts the kernel consumes).
# ---------------------------------------------------------------------------
def init_params(key):
    ks = jax.random.split(key, 8)

    def uniform(k, shape, fan_in):
        bound = 1.0 / math.sqrt(fan_in)
        return jax.random.uniform(k, shape, jnp.float32, -bound, bound)

    def conv(kw, kb, c_in, c_out, ksz):
        fan = c_in * ksz
        w = uniform(kw, (ksz * c_in, c_out), fan)    # rows: tap*c_in + ci
        b = uniform(kb, (c_out,), fan)
        return w, b

    w1, b1 = conv(ks[0], ks[1], INPUT_DIM, OUT_CH, K1)
    w2, b2 = conv(ks[2], ks[3], OUT_CH, OUT_CH, K2)
    w3, b3 = conv(ks[4], ks[5], OUT_CH, OUT_CH, K3)
    fan_fc = T3 * OUT_CH
    # fc weight stored (T3*OUT_CH, EMBED) with row index t*OUT_CH + c, i.e. the
    # PyTorch fc weight transposed with its input rows permuted from the
    # (c*7 + t) flatten order -- an equivalent parameterisation of the same net.
    wfc = uniform(ks[6], (T3 * OUT_CH, EMBED), fan_fc)
    bfc = uniform(ks[7], (1, EMBED), fan_fc)
    b_conv = jnp.stack([b1, b2, b3], axis=0)         # (3, OUT_CH) packed biases
    return dict(w1=w1, w2=w2, w3=w3, b_conv=b_conv, wfc=wfc, bfc=bfc)


# ---------------------------------------------------------------------------
# Pure-JAX reference (independent shifted-sum formulation)
# ---------------------------------------------------------------------------
def cnn_base_reference(x, p):
    hi = jax.lax.Precision.HIGHEST
    x = x.reshape(-1, INPUT_DIM, T_STEPS).astype(jnp.float32)
    h = jnp.transpose(x, (0, 2, 1))                  # (B, T, Cin)

    def conv(h, w_packed, bias, k):
        b_, t_in, c_in = h.shape
        t_out = t_in - k + 1
        y = jnp.zeros((b_, t_out, w_packed.shape[1]), jnp.float32) + bias
        for i in range(k):
            wk = w_packed[i * c_in:(i + 1) * c_in, :]
            y = y + jnp.einsum("btc,cd->btd", h[:, i:i + t_out, :], wk, precision=hi)
        return y

    def pool(h):
        t_pool = h.shape[1] // 2
        h = h[:, :2 * t_pool, :].reshape(h.shape[0], t_pool, 2, h.shape[2])
        return h.max(axis=2)

    h = jnp.maximum(pool(conv(h, p["w1"], p["b_conv"][0], K1)), 0.0)
    h = jnp.maximum(pool(conv(h, p["w2"], p["b_conv"][1], K2)), 0.0)
    h = jnp.maximum(conv(h, p["w3"], p["b_conv"][2], K3), 0.0)   # (B, 7, OUT_CH)
    h_flat = h.reshape(h.shape[0], -1)                           # rows: t*OUT_CH + c
    return jnp.dot(h_flat, p["wfc"], precision=hi) + p["bfc"]


if __name__ == "__main__":
    B = 8
    key = jax.random.PRNGKey(0)
    kx, kp = jax.random.split(key)
    x = jax.random.normal(kx, (B, INPUT_DIM, T_STEPS), jnp.float32)
    params = init_params(kp)

    out = jax.block_until_ready(jax.jit(cnn_base_forward)(x, params))
    ref = cnn_base_reference(x, params)

    assert out.shape == (B, EMBED), out.shape
    max_err = float(jnp.max(jnp.abs(out - ref)))
    assert jnp.allclose(out, ref, atol=2e-3, rtol=2e-3), \
        f"mismatch vs reference (max abs err {max_err})"
    print("KERNEL_OK")
</pallas_src>

<mosaic_0001>
module attributes {stable_mosaic.version = 11 : i64} {
  func.func @cnn_base_kernel(%arg0: i32, %arg1: memref<1x50x6xf32, #tpu.memory_space<vmem>>, %arg2: memref<30x64xf32, #tpu.memory_space<vmem>>, %arg3: memref<320x64xf32, #tpu.memory_space<vmem>>, %arg4: memref<192x64xf32, #tpu.memory_space<vmem>>, %arg5: memref<3x64xf32, #tpu.memory_space<vmem>>, %arg6: memref<448x128xf32, #tpu.memory_space<vmem>>, %arg7: memref<1x128xf32, #tpu.memory_space<vmem>>, %arg8: memref<1x1x128xf32, #tpu.memory_space<vmem>>) attributes {dimension_semantics = [#tpu.dimension_semantics<parallel>], iteration_bounds = array<i64: 8>, scalar_prefetch = 0 : i64, scratch_operands = 0 : i64, tpu.core_type = #tpu.core_type<tc>, window_params = [{transform_indices = @transform_0, window_bounds = array<i64: 1, 50, 6>}, {pipeline_mode = #tpu.pipeline_mode<synchronous>, transform_indices = @transform_1, window_bounds = array<i64: 30, 64>}, {pipeline_mode = #tpu.pipeline_mode<synchronous>, transform_indices = @transform_2, window_bounds = array<i64: 320, 64>}, {pipeline_mode = #tpu.pipeline_mode<synchronous>, transform_indices = @transform_3, window_bounds = array<i64: 192, 64>}, {pipeline_mode = #tpu.pipeline_mode<synchronous>, transform_indices = @transform_4, window_bounds = array<i64: 3, 64>}, {pipeline_mode = #tpu.pipeline_mode<synchronous>, transform_indices = @transform_5, window_bounds = array<i64: 448, 128>}, {pipeline_mode = #tpu.pipeline_mode<synchronous>, transform_indices = @transform_6, window_bounds = array<i64: 1, 128>}, {transform_indices = @transform_7, window_bounds = array<i64: 1, 1, 128>}]} {
    %c0 = arith.constant 0 : index
    %c0_0 = arith.constant 0 : index
    %c0_1 = arith.constant 0 : index
    %0 = vector.load %arg1[%c0, %c0_0, %c0_1] : memref<1x50x6xf32, #tpu.memory_space<vmem>>, vector<1x50x6xf32>
    %1 = vector.shape_cast %0 : vector<1x50x6xf32> to vector<50x6xf32>
    %c0_2 = arith.constant 0 : index
    %c0_3 = arith.constant 0 : index
    %2 = vector.load %arg2[%c0_2, %c0_3] : memref<30x64xf32, #tpu.memory_space<vmem>>, vector<30x64xf32>
    %c0_4 = arith.constant 0 : index
    %c0_5 = arith.constant 0 : index
    %3 = vector.load %arg3[%c0_4, %c0_5] : memref<320x64xf32, #tpu.memory_space<vmem>>, vector<320x64xf32>
    %c0_6 = arith.constant 0 : index
    %c0_7 = arith.constant 0 : index
    %4 = vector.load %arg4[%c0_6, %c0_7] : memref<192x64xf32, #tpu.memory_space<vmem>>, vector<192x64xf32>
    %c0_8 = arith.constant 0 : index
    %c0_9 = arith.constant 0 : index
    %5 = vector.load %arg5[%c0_8, %c0_9] : memref<3x64xf32, #tpu.memory_space<vmem>>, vector<3x64xf32>
    %c0_10 = arith.constant 0 : index
    %c0_11 = arith.constant 0 : index
    %6 = vector.load %arg6[%c0_10, %c0_11] : memref<448x128xf32, #tpu.memory_space<vmem>>, vector<448x128xf32>
    %c0_12 = arith.constant 0 : index
    %c0_13 = arith.constant 0 : index
    %7 = vector.load %arg7[%c0_12, %c0_13] : memref<1x128xf32, #tpu.memory_space<vmem>>, vector<1x128xf32>
    %8 = vector.extract_strided_slice %5 {offsets = [0, 0], sizes = [1, 64], strides = [1, 1]} : vector<3x64xf32> to vector<1x64xf32>
    %9 = vector.extract_strided_slice %1 {offsets = [0, 0], sizes = [46, 6], strides = [1, 1]} : vector<50x6xf32> to vector<46x6xf32>
    %10 = vector.extract_strided_slice %2 {offsets = [0, 0], sizes = [6, 64], strides = [1, 1]} : vector<30x64xf32> to vector<6x64xf32>
    %cst = arith.constant dense<0.000000e+00> : vector<46x64xf32>
    %11 = tpu.matmul %9, %10, %cst {dimension_numbers = #tpu.dot_dimension_numbers<[1], [0], [0], [1], [0, 0, 1, 1], [], []>} : vector<46x6xf32>, vector<6x64xf32>, vector<46x64xf32> -> vector<46x64xf32>
    %12 = vector.extract_strided_slice %1 {offsets = [1, 0], sizes = [46, 6], strides = [1, 1]} : vector<50x6xf32> to vector<46x6xf32>
    %13 = vector.extract_strided_slice %2 {offsets = [6, 0], sizes = [6, 64], strides = [1, 1]} : vector<30x64xf32> to vector<6x64xf32>
    %cst_14 = arith.constant dense<0.000000e+00> : vector<46x64xf32>
    %14 = tpu.matmul %12, %13, %cst_14 {dimension_numbers = #tpu.dot_dimension_numbers<[1], [0], [0], [1], [0, 0, 1, 1], [], []>} : vector<46x6xf32>, vector<6x64xf32>, vector<46x64xf32> -> vector<46x64xf32>
    %15 = arith.addf %11, %14 : vector<46x64xf32>
    %16 = vector.extract_strided_slice %1 {offsets = [2, 0], sizes = [46, 6], strides = [1, 1]} : vector<50x6xf32> to vector<46x6xf32>
    %17 = vector.extract_strided_slice %2 {offsets = [12, 0], sizes = [6, 64], strides = [1, 1]} : vector<30x64xf32> to vector<6x64xf32>
    %cst_15 = arith.constant dense<0.000000e+00> : vector<46x64xf32>
    %18 = tpu.matmul %16, %17, %cst_15 {dimension_numbers = #tpu.dot_dimension_numbers<[1], [0], [0], [1], [0, 0, 1, 1], [], []>} : vector<46x6xf32>, vector<6x64xf32>, vector<46x64xf32> -> vector<46x64xf32>
    %19 = arith.addf %15, %18 : vector<46x64xf32>
    %20 = vector.extract_strided_slice %1 {offsets = [3, 0], sizes = [46, 6], strides = [1, 1]} : vector<50x6xf32> to vector<46x6xf32>
    %21 = vector.extract_strided_slice %2 {offsets = [18, 0], sizes = [6, 64], strides = [1, 1]} : vector<30x64xf32> to vector<6x64xf32>
    %cst_16 = arith.constant dense<0.000000e+00> : vector<46x64xf32>
    %22 = tpu.matmul %20, %21, %cst_16 {dimension_numbers = #tpu.dot_dimension_numbers<[1], [0], [0], [1], [0, 0, 1, 1], [], []>} : vector<46x6xf32>, vector<6x64xf32>, vector<46x64xf32> -> vector<46x64xf32>
    %23 = arith.addf %19, %22 : vector<46x64xf32>
    %24 = vector.extract_strided_slice %1 {offsets = [4, 0], sizes = [46, 6], strides = [1, 1]} : vector<50x6xf32> to vector<46x6xf32>
    %25 = vector.extract_strided_slice %2 {offsets = [24, 0], sizes = [6, 64], strides = [1, 1]} : vector<30x64xf32> to vector<6x64xf32>
    %cst_17 = arith.constant dense<0.000000e+00> : vector<46x64xf32>
    %26 = tpu.matmul %24, %25, %cst_17 {dimension_numbers = #tpu.dot_dimension_numbers<[1], [0], [0], [1], [0, 0, 1, 1], [], []>} : vector<46x6xf32>, vector<6x64xf32>, vector<46x64xf32> -> vector<46x64xf32>
    %27 = arith.addf %23, %26 : vector<46x64xf32>
    %28 = vector.broadcast %8 : vector<1x64xf32> to vector<46x64xf32>
    %29 = arith.addf %27, %28 : vector<46x64xf32>
    %30 = vector.extract_strided_slice %29 {offsets = [0, 0], sizes = [45, 64], strides = [1, 1]} : vector<46x64xf32> to vector<45x64xf32>
    %31 = vector.extract_strided_slice %29 {offsets = [1, 0], sizes = [45, 64], strides = [1, 1]} : vector<46x64xf32> to vector<45x64xf32>
    %32 = arith.maximumf %30, %31 : vector<45x64xf32>
    %33 = tpu.iota {dimensions = array<i32: 0>} : vector<23x45xi32>
    %34 = tpu.iota {dimensions = array<i32: 1>} : vector<23x45xi32>
    %c2_i32 = arith.constant 2 : i32
    %35 = vector.broadcast %c2_i32 : i32 to vector<23x45xi32>
    %36 = arith.muli %35, %33 : vector<23x45xi32>
    %37 = arith.cmpi eq, %34, %36 : vector<23x45xi32>
    %38 = arith.extui %37 : vector<23x45xi1> to vector<23x45xi32>
    %39 = arith.sitofp %38 : vector<23x45xi32> to vector<23x45xf32>
    %cst_18 = arith.constant dense<0.000000e+00> : vector<23x64xf32>
    %40 = tpu.matmul %39, %32, %cst_18 {dimension_numbers = #tpu.dot_dimension_numbers<[1], [0], [0], [1], [0, 0, 1, 1], [], []>} : vector<23x45xf32>, vector<45x64xf32>, vector<23x64xf32> -> vector<23x64xf32>
    %cst_19 = arith.constant 0.000000e+00 : f32
    %41 = vector.broadcast %cst_19 : f32 to vector<23x64xf32>
    %42 = arith.maximumf %40, %41 : vector<23x64xf32>
    %43 = vector.extract_strided_slice %5 {offsets = [1, 0], sizes = [1, 64], strides = [1, 1]} : vector<3x64xf32> to vector<1x64xf32>
    %44 = vector.extract_strided_slice %42 {offsets = [0, 0], sizes = [19, 64], strides = [1, 1]} : vector<23x64xf32> to vector<19x64xf32>
    %45 = vector.extract_strided_slice %3 {offsets = [0, 0], sizes = [64, 64], strides = [1, 1]} : vector<320x64xf32> to vector<64x64xf32>
    %cst_20 = arith.constant dense<0.000000e+00> : vector<19x64xf32>
    %46 = tpu.matmul %44, %45, %cst_20 {dimension_numbers = #tpu.dot_dimension_numbers<[1], [0], [0], [1], [0, 0, 1, 1], [], []>} : vector<19x64xf32>, vector<64x64xf32>, vector<19x64xf32> -> vector<19x64xf32>
    %47 = vector.extract_strided_slice %42 {offsets = [1, 0], sizes = [19, 64], strides = [1, 1]} : vector<23x64xf32> to vector<19x64xf32>
    %48 = vector.extract_strided_slice %3 {offsets = [64, 0], sizes = [64, 64], strides = [1, 1]} : vector<320x64xf32> to vector<64x64xf32>
    %cst_21 = arith.constant dense<0.000000e+00> : vector<19x64xf32>
    %49 = tpu.matmul %47, %48, %cst_21 {dimension_numbers = #tpu.dot_dimension_numbers<[1], [0], [0], [1], [0, 0, 1, 1], [], []>} : vector<19x64xf32>, vector<64x64xf32>, vector<19x64xf32> -> vector<19x64xf32>
    %50 = arith.addf %46, %49 : vector<19x64xf32>
    %51 = vector.extract_strided_slice %42 {offsets = [2, 0], sizes = [19, 64], strides = [1, 1]} : vector<23x64xf32> to vector<19x64xf32>
    %52 = vector.extract_strided_slice %3 {offsets = [128, 0], sizes = [64, 64], strides = [1, 1]} : vector<320x64xf32> to vector<64x64xf32>
    %cst_22 = arith.constant dense<0.000000e+00> : vector<19x64xf32>
    %53 = tpu.matmul %51, %52, %cst_22 {dimension_numbers = #tpu.dot_dimension_numbers<[1], [0], [0], [1], [0, 0, 1, 1], [], []>} : vector<19x64xf32>, vector<64x64xf32>, vector<19x64xf32> -> vector<19x64xf32>
    %54 = arith.addf %50, %53 : vector<19x64xf32>
    %55 = vector.extract_strided_slice %42 {offsets = [3, 0], sizes = [19, 64], strides = [1, 1]} : vector<23x64xf32> to vector<19x64xf32>
    %56 = vector.extract_strided_slice %3 {offsets = [192, 0], sizes = [64, 64], strides = [1, 1]} : vector<320x64xf32> to vector<64x64xf32>
    %cst_23 = arith.constant dense<0.000000e+00> : vector<19x64xf32>
    %57 = tpu.matmul %55, %56, %cst_23 {dimension_numbers = #tpu.dot_dimension_numbers<[1], [0], [0], [1], [0, 0, 1, 1], [], []>} : vector<19x64xf32>, vector<64x64xf32>, vector<19x64xf32> -> vector<19x64xf32>
    %58 = arith.addf %54, %57 : vector<19x64xf32>
    %59 = vector.extract_strided_slice %42 {offsets = [4, 0], sizes = [19, 64], strides = [1, 1]} : vector<23x64xf32> to vector<19x64xf32>
    %60 = vector.extract_strided_slice %3 {offsets = [256, 0], sizes = [64, 64], strides = [1, 1]} : vector<320x64xf32> to vector<64x64xf32>
    %cst_24 = arith.constant dense<0.000000e+00> : vector<19x64xf32>
    %61 = tpu.matmul %59, %60, %cst_24 {dimension_numbers = #tpu.dot_dimension_numbers<[1], [0], [0], [1], [0, 0, 1, 1], [], []>} : vector<19x64xf32>, vector<64x64xf32>, vector<19x64xf32> -> vector<19x64xf32>
    %62 = arith.addf %58, %61 : vector<19x64xf32>
    %63 = vector.broadcast %43 : vector<1x64xf32> to vector<19x64xf32>
    %64 = arith.addf %62, %63 : vector<19x64xf32>
    %65 = vector.extract_strided_slice %64 {offsets = [0, 0], sizes = [18, 64], strides = [1, 1]} : vector<19x64xf32> to vector<18x64xf32>
    %66 = vector.extract_strided_slice %64 {offsets = [1, 0], sizes = [18, 64], strides = [1, 1]} : vector<19x64xf32> to vector<18x64xf32>
    %67 = arith.maximumf %65, %66 : vector<18x64xf32>
    %68 = tpu.iota {dimensions = array<i32: 0>} : vector<9x18xi32>
    %69 = tpu.iota {dimensions = array<i32: 1>} : vector<9x18xi32>
    %c2_i32_25 = arith.constant 2 : i32
    %70 = vector.broadcast %c2_i32_25 : i32 to vector<9x18xi32>
    %71 = arith.muli %70, %68 : vector<9x18xi32>
    %72 = arith.cmpi eq, %69, %71 : vector<9x18xi32>
    %73 = arith.extui %72 : vector<9x18xi1> to vector<9x18xi32>
    %74 = arith.sitofp %73 : vector<9x18xi32> to vector<9x18xf32>
    %cst_26 = arith.constant dense<0.000000e+00> : vector<9x64xf32>
    %75 = tpu.matmul %74, %67, %cst_26 {dimension_numbers = #tpu.dot_dimension_numbers<[1], [0], [0], [1], [0, 0, 1, 1], [], []>} : vector<9x18xf32>, vector<18x64xf32>, vector<9x64xf32> -> vector<9x64xf32>
    %cst_27 = arith.constant 0.000000e+00 : f32
    %76 = vector.broadcast %cst_27 : f32 to vector<9x64xf32>
    %77 = arith.maximumf %75, %76 : vector<9x64xf32>
    %78 = vector.extract_strided_slice %5 {offsets = [2, 0], sizes = [1, 64], strides = [1, 1]} : vector<3x64xf32> to vector<1x64xf32>
    %79 = vector.extract_strided_slice %77 {offsets = [0, 0], sizes = [7, 64], strides = [1, 1]} : vector<9x64xf32> to vector<7x64xf32>
    %80 = vector.extract_strided_slice %4 {offsets = [0, 0], sizes = [64, 64], strides = [1, 1]} : vector<192x64xf32> to vector<64x64xf32>
    %cst_28 = arith.constant dense<0.000000e+00> : vector<7x64xf32>
    %81 = tpu.matmul %79, %80, %cst_28 {dimension_numbers = #tpu.dot_dimension_numbers<[1], [0], [0], [1], [0, 0, 1, 1], [], []>} : vector<7x64xf32>, vector<64x64xf32>, vector<7x64xf32> -> vector<7x64xf32>
    %82 = vector.extract_strided_slice %77 {offsets = [1, 0], sizes = [7, 64], strides = [1, 1]} : vector<9x64xf32> to vector<7x64xf32>
    %83 = vector.extract_strided_slice %4 {offsets = [64, 0], sizes = [64, 64], strides = [1, 1]} : vector<192x64xf32> to vector<64x64xf32>
    %cst_29 = arith.constant dense<0.000000e+00> : vector<7x64xf32>
    %84 = tpu.matmul %82, %83, %cst_29 {dimension_numbers = #tpu.dot_dimension_numbers<[1], [0], [0], [1], [0, 0, 1, 1], [], []>} : vector<7x64xf32>, vector<64x64xf32>, vector<7x64xf32> -> vector<7x64xf32>
    %85 = arith.addf %81, %84 : vector<7x64xf32>
    %86 = vector.extract_strided_slice %77 {offsets = [2, 0], sizes = [7, 64], strides = [1, 1]} : vector<9x64xf32> to vector<7x64xf32>
    %87 = vector.extract_strided_slice %4 {offsets = [128, 0], sizes = [64, 64], strides = [1, 1]} : vector<192x64xf32> to vector<64x64xf32>
    %cst_30 = arith.constant dense<0.000000e+00> : vector<7x64xf32>
    %88 = tpu.matmul %86, %87, %cst_30 {dimension_numbers = #tpu.dot_dimension_numbers<[1], [0], [0], [1], [0, 0, 1, 1], [], []>} : vector<7x64xf32>, vector<64x64xf32>, vector<7x64xf32> -> vector<7x64xf32>
    %89 = arith.addf %85, %88 : vector<7x64xf32>
    %90 = vector.broadcast %78 : vector<1x64xf32> to vector<7x64xf32>
    %91 = arith.addf %89, %90 : vector<7x64xf32>
    %cst_31 = arith.constant 0.000000e+00 : f32
    %92 = vector.broadcast %cst_31 : f32 to vector<7x64xf32>
    %93 = arith.maximumf %91, %92 : vector<7x64xf32>
    %94 = vector.extract_strided_slice %93 {offsets = [0, 0], sizes = [1, 64], strides = [1, 1]} : vector<7x64xf32> to vector<1x64xf32>
    %95 = vector.extract_strided_slice %6 {offsets = [0, 0], sizes = [64, 128], strides = [1, 1]} : vector<448x128xf32> to vector<64x128xf32>
    %cst_32 = arith.constant dense<0.000000e+00> : vector<1x128xf32>
    %96 = tpu.matmul %94, %95, %cst_32 {dimension_numbers = #tpu.dot_dimension_numbers<[1], [0], [0], [1], [0, 0, 1, 1], [], []>} : vector<1x64xf32>, vector<64x128xf32>, vector<1x128xf32> -> vector<1x128xf32>
    %97 = arith.addf %7, %96 : vector<1x128xf32>
    %98 = vector.extract_strided_slice %93 {offsets = [1, 0], sizes = [1, 64], strides = [1, 1]} : vector<7x64xf32> to vector<1x64xf32>
    %99 = vector.extract_strided_slice %6 {offsets = [64, 0], sizes = [64, 128], strides = [1, 1]} : vector<448x128xf32> to vector<64x128xf32>
    %cst_33 = arith.constant dense<0.000000e+00> : vector<1x128xf32>
    %100 = tpu.matmul %98, %99, %cst_33 {dimension_numbers = #tpu.dot_dimension_numbers<[1], [0], [0], [1], [0, 0, 1, 1], [], []>} : vector<1x64xf32>, vector<64x128xf32>, vector<1x128xf32> -> vector<1x128xf32>
    %101 = arith.addf %97, %100 : vector<1x128xf32>
    %102 = vector.extract_strided_slice %93 {offsets = [2, 0], sizes = [1, 64], strides = [1, 1]} : vector<7x64xf32> to vector<1x64xf32>
    %103 = vector.extract_strided_slice %6 {offsets = [128, 0], sizes = [64, 128], strides = [1, 1]} : vector<448x128xf32> to vector<64x128xf32>
    %cst_34 = arith.constant dense<0.000000e+00> : vector<1x128xf32>
    %104 = tpu.matmul %102, %103, %cst_34 {dimension_numbers = #tpu.dot_dimension_numbers<[1], [0], [0], [1], [0, 0, 1, 1], [], []>} : vector<1x64xf32>, vector<64x128xf32>, vector<1x128xf32> -> vector<1x128xf32>
    %105 = arith.addf %101, %104 : vector<1x128xf32>
    %106 = vector.extract_strided_slice %93 {offsets = [3, 0], sizes = [1, 64], strides = [1, 1]} : vector<7x64xf32> to vector<1x64xf32>
    %107 = vector.extract_strided_slice %6 {offsets = [192, 0], sizes = [64, 128], strides = [1, 1]} : vector<448x128xf32> to vector<64x128xf32>
    %cst_35 = arith.constant dense<0.000000e+00> : vector<1x128xf32>
    %108 = tpu.matmul %106, %107, %cst_35 {dimension_numbers = #tpu.dot_dimension_numbers<[1], [0], [0], [1], [0, 0, 1, 1], [], []>} : vector<1x64xf32>, vector<64x128xf32>, vector<1x128xf32> -> vector<1x128xf32>
    %109 = arith.addf %105, %108 : vector<1x128xf32>
    %110 = vector.extract_strided_slice %93 {offsets = [4, 0], sizes = [1, 64], strides = [1, 1]} : vector<7x64xf32> to vector<1x64xf32>
    %111 = vector.extract_strided_slice %6 {offsets = [256, 0], sizes = [64, 128], strides = [1, 1]} : vector<448x128xf32> to vector<64x128xf32>
    %cst_36 = arith.constant dense<0.000000e+00> : vector<1x128xf32>
    %112 = tpu.matmul %110, %111, %cst_36 {dimension_numbers = #tpu.dot_dimension_numbers<[1], [0], [0], [1], [0, 0, 1, 1], [], []>} : vector<1x64xf32>, vector<64x128xf32>, vector<1x128xf32> -> vector<1x128xf32>
    %113 = arith.addf %109, %112 : vector<1x128xf32>
    %114 = vector.extract_strided_slice %93 {offsets = [5, 0], sizes = [1, 64], strides = [1, 1]} : vector<7x64xf32> to vector<1x64xf32>
    %115 = vector.extract_strided_slice %6 {offsets = [320, 0], sizes = [64, 128], strides = [1, 1]} : vector<448x128xf32> to vector<64x128xf32>
    %cst_37 = arith.constant dense<0.000000e+00> : vector<1x128xf32>
    %116 = tpu.matmul %114, %115, %cst_37 {dimension_numbers = #tpu.dot_dimension_numbers<[1], [0], [0], [1], [0, 0, 1, 1], [], []>} : vector<1x64xf32>, vector<64x128xf32>, vector<1x128xf32> -> vector<1x128xf32>
    %117 = arith.addf %113, %116 : vector<1x128xf32>
    %118 = vector.extract_strided_slice %93 {offsets = [6, 0], sizes = [1, 64], strides = [1, 1]} : vector<7x64xf32> to vector<1x64xf32>
    %119 = vector.extract_strided_slice %6 {offsets = [384, 0], sizes = [64, 128], strides = [1, 1]} : vector<448x128xf32> to vector<64x128xf32>
    %cst_38 = arith.constant dense<0.000000e+00> : vector<1x128xf32>
    %120 = tpu.matmul %118, %119, %cst_38 {dimension_numbers = #tpu.dot_dimension_numbers<[1], [0], [0], [1], [0, 0, 1, 1], [], []>} : vector<1x64xf32>, vector<64x128xf32>, vector<1x128xf32> -> vector<1x128xf32>
    %121 = arith.addf %117, %120 : vector<1x128xf32>
    %c0_39 = arith.constant 0 : index
    %c0_40 = arith.constant 0 : index
    %c0_41 = arith.constant 0 : index
    %122 = vector.load %arg8[%c0_39, %c0_40, %c0_41] : memref<1x1x128xf32, #tpu.memory_space<vmem>>, vector<1x1x128xf32>
    %123 = vector.shape_cast %122 : vector<1x1x128xf32> to vector<1x128xf32>
    %124 = vector.shape_cast %121 : vector<1x128xf32> to vector<1x1x128xf32>
    tpu.vector_store %arg8[%c0_39, %c0_40, %c0_41], %124 {strides = array<i32>} : memref<1x1x128xf32, #tpu.memory_space<vmem>>, vector<1x1x128xf32>,
    return
  }
  func.func @transform_0(%arg0: i32) -> (i32, i32, i32) {
    %c0_i32 = arith.constant 0 : i32
    %c0_i32_0 = arith.constant 0 : i32
    %c0_i32_1 = arith.constant 0 : i32
    return %arg0, %c0_i32, %c0_i32_0 : i32, i32, i32
  }
  func.func @transform_1(%arg0: i32) -> (i32, i32) {
    %c0_i32 = arith.constant 0 : i32
    %c0_i32_0 = arith.constant 0 : i32
    %c0_i32_1 = arith.constant 0 : i32
    return %c0_i32, %c0_i32_0 : i32, i32
  }
  func.func @transform_2(%arg0: i32) -> (i32, i32) {
    %c0_i32 = arith.constant 0 : i32
    %c0_i32_0 = arith.constant 0 : i32
    %c0_i32_1 = arith.constant 0 : i32
    return %c0_i32, %c0_i32_0 : i32, i32
  }
  func.func @transform_3(%arg0: i32) -> (i32, i32) {
    %c0_i32 = arith.constant 0 : i32
    %c0_i32_0 = arith.constant 0 : i32
    %c0_i32_1 = arith.constant 0 : i32
    return %c0_i32, %c0_i32_0 : i32, i32
  }
  func.func @transform_4(%arg0: i32) -> (i32, i32) {
    %c0_i32 = arith.constant 0 : i32
    %c0_i32_0 = arith.constant 0 : i32
    %c0_i32_1 = arith.constant 0 : i32
    return %c0_i32, %c0_i32_0 : i32, i32
  }
  func.func @transform_5(%arg0: i32) -> (i32, i32) {
    %c0_i32 = arith.constant 0 : i32
    %c0_i32_0 = arith.constant 0 : i32
    %c0_i32_1 = arith.constant 0 : i32
    return %c0_i32, %c0_i32_0 : i32, i32
  }
  func.func @transform_6(%arg0: i32) -> (i32, i32) {
    %c0_i32 = arith.constant 0 : i32
    %c0_i32_0 = arith.constant 0 : i32
    %c0_i32_1 = arith.constant 0 : i32
    return %c0_i32, %c0_i32_0 : i32, i32
  }
  func.func @transform_7(%arg0: i32) -> (i32, i32, i32) {
    %c0_i32 = arith.constant 0 : i32
    %c0_i32_0 = arith.constant 0 : i32
    %c0_i32_1 = arith.constant 0 : i32
    return %arg0, %c0_i32, %c0_i32_0 : i32, i32, i32
  }
}

</mosaic_0001>

<llo_original>
// kernel: cnn_base_forward.1
$region0: #{cnn_base_forward.1}
  #allocation0 [shape = 'u32[]', space=smem, size = 0x4, offset = 0x4, fixed_abs, tag = 'smem constant byte address 0x4 - core index']
  #allocation1 [shape = 'u32[144,128]{1,0:T(1,128)}', space=vmem, size = 0x12000, scoped, tag = 'internal scratch']
  %s0 = inlined_call_operand.vmem [shape: f32[8,50,6], index: 0, kind: input, shape index: {}]
  %s1 = inlined_call_operand.vmem [shape: f32[30,64], index: 1, kind: input, shape index: {}]
  %s2 = inlined_call_operand.vmem [shape: f32[320,64], index: 2, kind: input, shape index: {}]
  %s3 = inlined_call_operand.vmem [shape: f32[192,64], index: 3, kind: input, shape index: {}]
  %s4 = inlined_call_operand.vmem [shape: f32[3,64], index: 4, kind: input, shape index: {}]
  %s5 = inlined_call_operand.vmem [shape: f32[448,128], index: 5, kind: input, shape index: {}]
  %s6 = inlined_call_operand.vmem [shape: f32[1,128], index: 6, kind: input, shape index: {}]
  %s7 = inlined_call_operand.hbm [shape: f32[8,1,128], index: 7, kind: output, shape index: {}]
  %s8 = sld [smem:[#allocation0]]
  $region61: #{cnn_base_forward.1} parent=0
    _
  %s10 = ssub.s32 1, %s8
  %s11 = scalar_select 0, %s10, %s8
  $region1: #{cnn_base_forward.1} parent=0
    #allocation2 [shape = 'u8[1024]{0}', space=vmem, size = 0x400, scoped, tag = 'output window, operand 0']
    #allocation3 [shape = 's32[2]{0}', space=sflag, size = 0x8, scoped, tag = 'scoped memory for cnn_base_forward.1']
    %12 = vsyncpa [#allocation3], 0
    %s13 = scalar_lea.sflag [#allocation3], 1
    %14 = vsyncpa %s13, 0
    loop: start=0, step=1, limit=10
    $region2: #{cnn_base_forward.1} parent=1 // loop_pre_header
      _
    $region3: #{cnn_base_forward.1} parent=1 // loop_header
      %s16 = sphi 0, %s20
      %p17 = scmp.ge.s32.totalorder %s16, 10
      %s26 = sphi 0, %s28
      %s29 = sphi 0, %s26
      %s30 = sphi 0, %s29
      %s46 = sphi 0, %s30
      %s50 = sphi 0, %s50
      %s52 = sphi 0, %s50
      %s53 = sphi 0, %s52
      %s67 = sphi 0, %s53
      %s71 = sphi 0, %s71
      %s73 = sphi 0, %s71
      %s74 = sphi 0, %s73
      %s88 = sphi 0, %s74
      %s92 = sphi 0, %s92
      %s94 = sphi 0, %s92
      %s95 = sphi 0, %s94
      %s109 = sphi 0, %s95
      %s113 = sphi 0, %s113
      %s115 = sphi 0, %s113
      %s116 = sphi 0, %s115
      %s130 = sphi 0, %s116
      %s134 = sphi 0, %s134
      %s136 = sphi 0, %s134
      %s137 = sphi 0, %s136
      %s151 = sphi 0, %s137
      %s155 = sphi 0, %s155
      %s157 = sphi 0, %s155
      %s158 = sphi 0, %s157
      %s172 = sphi 0, %s158
      %s178 = sphi 0, %s180
      %s181 = sphi 0, %s178
      %s182 = sphi 0, %s181
      %s198 = sphi 0, %s182
    $region4: #{cnn_base_forward.1} parent=1 // loop_header_branch
      %19 = sbr.rel (%p17) target = $region8
    $region5: #{cnn_base_forward.1} parent=1 // loop_body
      %s21 = ssub.s32 %s16, 1
      %s22 = ssub.s32 %s16, 2
      %s23 = sadd.s32 %s16, 1
      %s24 = ssub.s32 %s16, %s23
      %p25 = scmp.eq.s32.totalorder %s24, 0
      %s27 = sadd.s32 %s26, 1
      %s28 = scalar_select %p25, %s26, %s27
      %p31 = pneg %p25
      %p32 = scmp.eq.s32.totalorder %s16, 7
      %p33 = por %p31, %p32
      %p34 = scmp.ne.s32.totalorder %s26, %s29
      %p35 = scmp.eq.s32.totalorder %s16, 0
      %p36 = por %p34, %p35
      %p37 = scmp.ne.s32.totalorder %s26, %s29
      %p38 = scmp.eq.s32.totalorder %s21, 7
      %p39 = por %p37, %p38
      %p40 = scmp.ne.s32.totalorder %s29, %s30
      %p41 = scmp.eq.s32.totalorder %s21, 0
      %p42 = por %p40, %p41
      %p43 = scmp.ne.s32.totalorder %s29, %s30
      %p44 = scmp.eq.s32.totalorder %s22, 7
      %p45 = por %p43, %p44
      %p47 = scmp.ne.s32.totalorder %s30, %s46
      %p48 = scmp.eq.s32.totalorder %s22, 0
      %p49 = por %p47, %p48
      %s51 = sadd.s32 %s50, 1
      %p54 = scmp.eq.s32.totalorder %s16, 7
      %p55 = scmp.ne.s32.totalorder %s50, %s52
      %p56 = scmp.eq.s32.totalorder %s16, 0
      %p57 = por %p55, %p56
      %p58 = scmp.ne.s32.totalorder %s50, %s52
      %p59 = scmp.eq.s32.totalorder %s21, 7
      %p60 = por %p58, %p59
      %p61 = scmp.ne.s32.totalorder %s52, %s53
      %p62 = scmp.eq.s32.totalorder %s21, 0
      %p63 = por %p61, %p62
      %p64 = scmp.ne.s32.totalorder %s52, %s53
      %p65 = scmp.eq.s32.totalorder %s22, 7
      %p66 = por %p64, %p65
      %p68 = scmp.ne.s32.totalorder %s53, %s67
      %p69 = scmp.eq.s32.totalorder %s22, 0
      %p70 = por %p68, %p69
      %s72 = sadd.s32 %s71, 1
      %p75 = scmp.eq.s32.totalorder %s16, 7
      %p76 = scmp.ne.s32.totalorder %s71, %s73
      %p77 = scmp.eq.s32.totalorder %s16, 0
      %p78 = por %p76, %p77
      %p79 = scmp.ne.s32.totalorder %s71, %s73
      %p80 = scmp.eq.s32.totalorder %s21, 7
      %p81 = por %p79, %p80
      %p82 = scmp.ne.s32.totalorder %s73, %s74
      %p83 = scmp.eq.s32.totalorder %s21, 0
      %p84 = por %p82, %p83
      %p85 = scmp.ne.s32.totalorder %s73, %s74
      %p86 = scmp.eq.s32.totalorder %s22, 7
      %p87 = por %p85, %p86
      %p89 = scmp.ne.s32.totalorder %s74, %s88
      %p90 = scmp.eq.s32.totalorder %s22, 0
      %p91 = por %p89, %p90
      %s93 = sadd.s32 %s92, 1
      %p96 = scmp.eq.s32.totalorder %s16, 7
      %p97 = scmp.ne.s32.totalorder %s92, %s94
      %p98 = scmp.eq.s32.totalorder %s16, 0
      %p99 = por %p97, %p98
      %p100 = scmp.ne.s32.totalorder %s92, %s94
      %p101 = scmp.eq.s32.totalorder %s21, 7
      %p102 = por %p100, %p101
      %p103 = scmp.ne.s32.totalorder %s94, %s95
      %p104 = scmp.eq.s32.totalorder %s21, 0
      %p105 = por %p103, %p104
      %p106 = scmp.ne.s32.totalorder %s94, %s95
      %p107 = scmp.eq.s32.totalorder %s22, 7
      %p108 = por %p106, %p107
      %p110 = scmp.ne.s32.totalorder %s95, %s109
      %p111 = scmp.eq.s32.totalorder %s22, 0
      %p112 = por %p110, %p111
      %s114 = sadd.s32 %s113, 1
      %p117 = scmp.eq.s32.totalorder %s16, 7
      %p118 = scmp.ne.s32.totalorder %s113, %s115
      %p119 = scmp.eq.s32.totalorder %s16, 0
      %p120 = por %p118, %p119
      %p121 = scmp.ne.s32.totalorder %s113, %s115
      %p122 = scmp.eq.s32.totalorder %s21, 7
      %p123 = por %p121, %p122
      %p124 = scmp.ne.s32.totalorder %s115, %s116
      %p125 = scmp.eq.s32.totalorder %s21, 0
      %p126 = por %p124, %p125
      %p127 = scmp.ne.s32.totalorder %s115, %s116
      %p128 = scmp.eq.s32.totalorder %s22, 7
      %p129 = por %p127, %p128
      %p131 = scmp.ne.s32.totalorder %s116, %s130
      %p132 = scmp.eq.s32.totalorder %s22, 0
      %p133 = por %p131, %p132
      %s135 = sadd.s32 %s134, 1
      %p138 = scmp.eq.s32.totalorder %s16, 7
      %p139 = scmp.ne.s32.totalorder %s134, %s136
      %p140 = scmp.eq.s32.totalorder %s16, 0
      %p141 = por %p139, %p140
      %p142 = scmp.ne.s32.totalorder %s134, %s136
      %p143 = scmp.eq.s32.totalorder %s21, 7
      %p144 = por %p142, %p143
      %p145 = scmp.ne.s32.totalorder %s136, %s137
      %p146 = scmp.eq.s32.totalorder %s21, 0
      %p147 = por %p145, %p146
      %p148 = scmp.ne.s32.totalorder %s136, %s137
      %p149 = scmp.eq.s32.totalorder %s22, 7
      %p150 = por %p148, %p149
      %p152 = scmp.ne.s32.totalorder %s137, %s151
      %p153 = scmp.eq.s32.totalorder %s22, 0
      %p154 = por %p152, %p153
      %s156 = sadd.s32 %s155, 1
      %p159 = scmp.eq.s32.totalorder %s16, 7
      %p160 = scmp.ne.s32.totalorder %s155, %s157
      %p161 = scmp.eq.s32.totalorder %s16, 0
      %p162 = por %p160, %p161
      %p163 = scmp.ne.s32.totalorder %s155, %s157
      %p164 = scmp.eq.s32.totalorder %s21, 7
      %p165 = por %p163, %p164
      %p166 = scmp.ne.s32.totalorder %s157, %s158
      %p167 = scmp.eq.s32.totalorder %s21, 0
      %p168 = por %p166, %p167
      %p169 = scmp.ne.s32.totalorder %s157, %s158
      %p170 = scmp.eq.s32.totalorder %s22, 7
      %p171 = por %p169, %p170
      %p173 = scmp.ne.s32.totalorder %s158, %s172
      %p174 = scmp.eq.s32.totalorder %s22, 0
      %p175 = por %p173, %p174
      %s176 = ssub.s32 %s16, %s23
      %p177 = scmp.eq.s32.totalorder %s176, 0
      %s179 = sadd.s32 %s178, 1
      %s180 = scalar_select %p177, %s178, %s179
      %p183 = pneg %p177
      %p184 = scmp.eq.s32.totalorder %s16, 7
      %p185 = por %p183, %p184
      %p186 = scmp.ne.s32.totalorder %s178, %s181
      %p187 = scmp.eq.s32.totalorder %s16, 0
      %p188 = por %p186, %p187
      %p189 = scmp.ne.s32.totalorder %s178, %s181
      %p190 = scmp.eq.s32.totalorder %s21, 7
      %p191 = por %p189, %p190
      %p192 = scmp.ne.s32.totalorder %s181, %s182
      %p193 = scmp.eq.s32.totalorder %s21, 0
      %p194 = por %p192, %p193
      %p195 = scmp.ne.s32.totalorder %s181, %s182
      %p196 = scmp.eq.s32.totalorder %s22, 7
      %p197 = por %p195, %p196
      %p199 = scmp.ne.s32.totalorder %s182, %s198
      %p200 = scmp.eq.s32.totalorder %s22, 0
      %p201 = por %p199, %p200
      %p202 = scmp.le.s32.totalorder 1, %s16
      %p203 = scmp.lt.s32.totalorder %s16, 9
      %p204 = pnand %p202, %p203
      %p205 = pneg %p204
      // Predicated region
      $region9: #{cnn_base_forward.1} parent=5 // pred_check
        _
      $region10: #{cnn_base_forward.1} parent=5 // pred_check_branch
        %207 = sbr.rel (%p204) target = $region12
      $region11: #{cnn_base_forward.1} parent=5 // pred_region
        %s208 = ssub.s32 %s16, 1
        // Predicated region
        $region13: #{cnn_base_forward.1} parent=11 // pred_check
          %p209 = pneg %p63
        $region14: #{cnn_base_forward.1} parent=11 // pred_check_branch
          %211 = sbr.rel (%p209) target = $region16
        $region15: #{cnn_base_forward.1} parent=11 // pred_region
          _
        $region16: #{cnn_base_forward.1} parent=11 // pred_fallthru
          _
        // Predicated region
        $region17: #{cnn_base_forward.1} parent=11 // pred_check
          %p212 = pneg %p84
        $region18: #{cnn_base_forward.1} parent=11 // pred_check_branch
          %214 = sbr.rel (%p212) target = $region20
        $region19: #{cnn_base_forward.1} parent=11 // pred_region
          _
        $region20: #{cnn_base_forward.1} parent=11 // pred_fallthru
          _
        // Predicated region
        $region21: #{cnn_base_forward.1} parent=11 // pred_check
          %p215 = pneg %p105
        $region22: #{cnn_base_forward.1} parent=11 // pred_check_branch
          %217 = sbr.rel (%p215) target = $region24
        $region23: #{cnn_base_forward.1} parent=11 // pred_region
          _
        $region24: #{cnn_base_forward.1} parent=11 // pred_fallthru
          _
        // Predicated region
        $region25: #{cnn_base_forward.1} parent=11 // pred_check
          %p218 = pneg %p126
        $region26: #{cnn_base_forward.1} parent=11 // pred_check_branch
          %220 = sbr.rel (%p218) target = $region28
        $region27: #{cnn_base_forward.1} parent=11 // pred_region
          _
        $region28: #{cnn_base_forward.1} parent=11 // pred_fallthru
          _
        // Predicated region
        $region29: #{cnn_base_forward.1} parent=11 // pred_check
          %p221 = pneg %p147
        $region30: #{cnn_base_forward.1} parent=11 // pred_check_branch
          %223 = sbr.rel (%p221) target = $region32
        $region31: #{cnn_base_forward.1} parent=11 // pred_region
          _
        $region32: #{cnn_base_forward.1} parent=11 // pred_fallthru
          _
        // Predicated region
        $region33: #{cnn_base_forward.1} parent=11 // pred_check
          %p224 = pneg %p168
        $region34: #{cnn_base_forward.1} parent=11 // pred_check_branch
          %226 = sbr.rel (%p224) target = $region36
        $region35: #{cnn_base_forward.1} parent=11 // pred_region
          _
        $region36: #{cnn_base_forward.1} parent=11 // pred_fallthru
          _
      $region12: #{cnn_base_forward.1} parent=5 // pred_fallthru
        _
      %p227 = scmp.lt.s32.totalorder %s16, 8
      // Predicated region
      $region37: #{cnn_base_forward.1} parent=5 // pred_check
        %p228 = pneg %p227
      $region38: #{cnn_base_forward.1} parent=5 // pred_check_branch
        %230 = sbr.rel (%p228) target = $region40
      $region39: #{cnn_base_forward.1} parent=5 // pred_region
        // Predicated region
        $region41: #{cnn_base_forward.1} parent=39 // pred_check
          %p231 = pneg %p36
        $region42: #{cnn_base_forward.1} parent=39 // pred_check_branch
          %233 = sbr.rel (%p231) target = $region44
        $region43: #{cnn_base_forward.1} parent=39 // pred_region
          %p234 = scmp.lt.s32.totalorder %s16, 7
          %s235 = scalar_select %p234, %s16, 7
          %s236 = smul.addr %s235, 7
          %s237 = smul.addr %s236, 8
          %s238 = scalar_lea.vmem %s0, %s237
        $region44: #{cnn_base_forward.1} parent=39 // pred_fallthru
          _
      $region40: #{cnn_base_forward.1} parent=5 // pred_fallthru
        _
      %p239 = scmp.le.s32.totalorder 1, %s16
      %p240 = scmp.lt.s32.totalorder %s16, 9
      %p241 = pnand %p239, %p240
      %p242 = pneg %p241
      // Predicated region
      $region45: #{cnn_base_forward.1} parent=5 // pred_check
        _
      $region46: #{cnn_base_forward.1} parent=5 // pred_check_branch
        %244 = sbr.rel (%p241) target = $region48
      $region47: #{cnn_base_forward.1} parent=5 // pred_region
        %s245 = ssub.s32 %s16, 1
        %p246 = scmp.lt.s32.totalorder %s21, 7
        %s247 = scalar_select %p246, %s21, 7
        %s248 = smul.addr %s247, 7
        %s249 = smul.addr %s248, 8
        %s250 = scalar_lea.vmem %s0, %s249
        %p251 = pneg %p42
        %p252 = pneg %p39
        %p253 = pneg %p63
        %p254 = pneg %p60
        %p255 = pneg %p84
        %p256 = pneg %p81
        %p257 = pneg %p105
        %p258 = pneg %p102
        %p259 = pneg %p126
        %p260 = pneg %p123
        %p261 = pneg %p147
        %p262 = pneg %p144
        %p263 = pneg %p168
        %p264 = pneg %p165
        %p265 = pneg %p194
        %p266 = pneg %p191
        %s267 = sand.u32 %s181, 1
        %s268 = scalar_lea.sflag [#allocation3], %s267
        %s269 = sand.u32 %s181, 1
        %s270 = scalar_lea.vmem [#allocation2], %s269
        %p271 = scmp.lt.s32.totalorder %s21, 7
        %s272 = scalar_select %p271, %s21, 7
        %s273 = smul.addr %s272, 7
        %s274 = smul.addr %s273, 8
        %s275 = scalar_lea.vmem %s0, %s274
        %v276 = vld [vmem:[%s275] sm:$0xff]
        %v277 = vld [vmem:[%s275 + $0x8] sm:$0xff]
        %v278 = vld [vmem:[%s275 + $0x10] sm:$0xff]
        %v279 = vld [vmem:[%s275 + $0x18] sm:$0xff]
        %v280 = vld [vmem:[%s275 + $0x20] sm:$0xff]
        %v281 = vld [vmem:[%s275 + $0x28] sm:$0xff]
        %v282 = vld [vmem:[%s275 + $0x30] sm:$0x3]
        %v283 = vld [vmem:[%s1] sm:$0xff]
        %v284 = vld [vmem:[%s1 + $0x8] sm:$0xff]
        %v285 = vld [vmem:[%s1 + $0x10] sm:$0xff]
        %v286 = vld [vmem:[%s1 + $0x18] sm:$0x3f]
        %v287 = vld [vmem:[%s2] sm:$0xff]
        %v288 = vld [vmem:[%s2 + $0x8] sm:$0xff]
        %v289 = vld [vmem:[%s2 + $0x10] sm:$0xff]
        %v290 = vld [vmem:[%s2 + $0x18] sm:$0xff]
        %v291 = vld [vmem:[%s2 + $0x20] sm:$0xff]
        %v292 = vld [vmem:[%s2 + $0x28] sm:$0xff]
        %v293 = vld [vmem:[%s2 + $0x30] sm:$0xff]
        %v294 = vld [vmem:[%s2 + $0x38] sm:$0xff]
        %v295 = vld [vmem:[%s2 + $0x40] sm:$0xff]
        %v296 = vld [vmem:[%s2 + $0x48] sm:$0xff]
        %v297 = vld [vmem:[%s2 + $0x50] sm:$0xff]
        %v298 = vld [vmem:[%s2 + $0x58] sm:$0xff]
        %v299 = vld [vmem:[%s2 + $0x60] sm:$0xff]
        %v300 = vld [vmem:[%s2 + $0x68] sm:$0xff]
        %v301 = vld [vmem:[%s2 + $0x70] sm:$0xff]
        %v302 = vld [vmem:[%s2 + $0x78] sm:$0xff]
        %v303 = vld [vmem:[%s2 + $0x80] sm:$0xff]
        %v304 = vld [vmem:[%s2 + $0x88] sm:$0xff]
        %v305 = vld [vmem:[%s2 + $0x90] sm:$0xff]
        %v306 = vld [vmem:[%s2 + $0x98] sm:$0xff]
        %v307 = vld [vmem:[%s2 + $0xa0] sm:$0xff]
        %v308 = vld [vmem:[%s2 + $0xa8] sm:$0xff]
        %v309 = vld [vmem:[%s2 + $0xb0] sm:$0xff]
        %v310 = vld [vmem:[%s2 + $0xb8] sm:$0xff]
        %v311 = vld [vmem:[%s2 + $0xc0] sm:$0xff]
        %v312 = vld [vmem:[%s2 + $0xc8] sm:$0xff]
        %v313 = vld [vmem:[%s2 + $0xd0] sm:$0xff]
        %v314 = vld [vmem:[%s2 + $0xd8] sm:$0xff]
        %v315 = vld [vmem:[%s2 + $0xe0] sm:$0xff]
        %v316 = vld [vmem:[%s2 + $0xe8] sm:$0xff]
        %v317 = vld [vmem:[%s2 + $0xf0] sm:$0xff]
        %v318 = vld [vmem:[%s2 + $0xf8] sm:$0xff]
        %v319 = vld [vmem:[%s2 + $0x100] sm:$0xff]
        %v320 = vld [vmem:[%s2 + $0x108] sm:$0xff]
        %v321 = vld [vmem:[%s2 + $0x110] sm:$0xff]
        %v322 = vld [vmem:[%s2 + $0x118] sm:$0xff]
        %v323 = vld [vmem:[%s2 + $0x120] sm:$0xff]
        %v324 = vld [vmem:[%s2 + $0x128] sm:$0xff]
        %v325 = vld [vmem:[%s2 + $0x130] sm:$0xff]
        %v326 = vld [vmem:[%s2 + $0x138] sm:$0xff]
        %v327 = vld [vmem:[%s3] sm:$0xff]
        %v328 = vld [vmem:[%s3 + $0x8] sm:$0xff]
        %v329 = vld [vmem:[%s3 + $0x10] sm:$0xff]
        %v330 = vld [vmem:[%s3 + $0x18] sm:$0xff]
        %v331 = vld [vmem:[%s3 + $0x20] sm:$0xff]
        %v332 = vld [vmem:[%s3 + $0x28] sm:$0xff]
        %v333 = vld [vmem:[%s3 + $0x30] sm:$0xff]
        %v334 = vld [vmem:[%s3 + $0x38] sm:$0xff]
        %v335 = vld [vmem:[%s3 + $0x40] sm:$0xff]
        %v336 = vld [vmem:[%s3 + $0x48] sm:$0xff]
        %v337 = vld [vmem:[%s3 + $0x50] sm:$0xff]
        %v338 = vld [vmem:[%s3 + $0x58] sm:$0xff]
        %v339 = vld [vmem:[%s3 + $0x60] sm:$0xff]
        %v340 = vld [vmem:[%s3 + $0x68] sm:$0xff]
        %v341 = vld [vmem:[%s3 + $0x70] sm:$0xff]
        %v342 = vld [vmem:[%s3 + $0x78] sm:$0xff]
        %v343 = vld [vmem:[%s3 + $0x80] sm:$0xff]
        %v344 = vld [vmem:[%s3 + $0x88] sm:$0xff]
        %v345 = vld [vmem:[%s3 + $0x90] sm:$0xff]
        %v346 = vld [vmem:[%s3 + $0x98] sm:$0xff]
        %v347 = vld [vmem:[%s3 + $0xa0] sm:$0xff]
        %v348 = vld [vmem:[%s3 + $0xa8] sm:$0xff]
        %v349 = vld [vmem:[%s3 + $0xb0] sm:$0xff]
        %v350 = vld [vmem:[%s3 + $0xb8] sm:$0xff]
        %v351 = vld [vmem:[%s4] sm:$0x7]
        %v352 = vld [vmem:[%s5] sm:$0xff]
        %v353 = vld [vmem:[%s5 + $0x8] sm:$0xff]
        %v354 = vld [vmem:[%s5 + $0x10] sm:$0xff]
        %v355 = vld [vmem:[%s5 + $0x18] sm:$0xff]
        %v356 = vld [vmem:[%s5 + $0x20] sm:$0xff]
        %v357 = vld [vmem:[%s5 + $0x28] sm:$0xff]
        %v358 = vld [vmem:[%s5 + $0x30] sm:$0xff]
        %v359 = vld [vmem:[%s5 + $0x38] sm:$0xff]
        %v360 = vld [vmem:[%s5 + $0x40] sm:$0xff]
        %v361 = vld [vmem:[%s5 + $0x48] sm:$0xff]
        %v362 = vld [vmem:[%s5 + $0x50] sm:$0xff]
        %v363 = vld [vmem:[%s5 + $0x58] sm:$0xff]
        %v364 = vld [vmem:[%s5 + $0x60] sm:$0xff]
        %v365 = vld [vmem:[%s5 + $0x68] sm:$0xff]
        %v366 = vld [vmem:[%s5 + $0x70] sm:$0xff]
        %v367 = vld [vmem:[%s5 + $0x78] sm:$0xff]
        %v368 = vld [vmem:[%s5 + $0x80] sm:$0xff]
        %v369 = vld [vmem:[%s5 + $0x88] sm:$0xff]
        %v370 = vld [vmem:[%s5 + $0x90] sm:$0xff]
        %v371 = vld [vmem:[%s5 + $0x98] sm:$0xff]
        %v372 = vld [vmem:[%s5 + $0xa0] sm:$0xff]
        %v373 = vld [vmem:[%s5 + $0xa8] sm:$0xff]
        %v374 = vld [vmem:[%s5 + $0xb0] sm:$0xff]
        %v375 = vld [vmem:[%s5 + $0xb8] sm:$0xff]
        %v376 = vld [vmem:[%s5 + $0xc0] sm:$0xff]
        %v377 = vld [vmem:[%s5 + $0xc8] sm:$0xff]
        %v378 = vld [vmem:[%s5 + $0xd0] sm:$0xff]
        %v379 = vld [vmem:[%s5 + $0xd8] sm:$0xff]
        %v380 = vld [vmem:[%s5 + $0xe0] sm:$0xff]
        %v381 = vld [vmem:[%s5 + $0xe8] sm:$0xff]
        %v382 = vld [vmem:[%s5 + $0xf0] sm:$0xff]
        %v383 = vld [vmem:[%s5 + $0xf8] sm:$0xff]
        %v384 = vld [vmem:[%s5 + $0x100] sm:$0xff]
        %v385 = vld [vmem:[%s5 + $0x108] sm:$0xff]
        %v386 = vld [vmem:[%s5 + $0x110] sm:$0xff]
        %v387 = vld [vmem:[%s5 + $0x118] sm:$0xff]
        %v388 = vld [vmem:[%s5 + $0x120] sm:$0xff]
        %v389 = vld [vmem:[%s5 + $0x128] sm:$0xff]
        %v390 = vld [vmem:[%s5 + $0x130] sm:$0xff]
        %v391 = vld [vmem:[%s5 + $0x138] sm:$0xff]
        %v392 = vld [vmem:[%s5 + $0x140] sm:$0xff]
        %v393 = vld [vmem:[%s5 + $0x148] sm:$0xff]
        %v394 = vld [vmem:[%s5 + $0x150] sm:$0xff]
        %v395 = vld [vmem:[%s5 + $0x158] sm:$0xff]
        %v396 = vld [vmem:[%s5 + $0x160] sm:$0xff]
        %v397 = vld [vmem:[%s5 + $0x168] sm:$0xff]
        %v398 = vld [vmem:[%s5 + $0x170] sm:$0xff]
        %v399 = vld [vmem:[%s5 + $0x178] sm:$0xff]
        %v400 = vld [vmem:[%s5 + $0x180] sm:$0xff]
        %v401 = vld [vmem:[%s5 + $0x188] sm:$0xff]
        %v402 = vld [vmem:[%s5 + $0x190] sm:$0xff]
        %v403 = vld [vmem:[%s5 + $0x198] sm:$0xff]
        %v404 = vld [vmem:[%s5 + $0x1a0] sm:$0xff]
        %v405 = vld [vmem:[%s5 + $0x1a8] sm:$0xff]
        %v406 = vld [vmem:[%s5 + $0x1b0] sm:$0xff]
        %v407 = vld [vmem:[%s5 + $0x1b8] sm:$0xff]
        %v408 = vld [vmem:[%s6] sm:$0x1]
        %vm415 = vcmask 1046528
        %v416 = vrot.slane %v276, 1
        %v417 = vrot.slane %v277, 1
        %v418 = vsel %vm415, %v416, %v417
        %v419 = vrot.slane %v278, 1
        %v420 = vsel %vm415, %v417, %v419
        %v421 = vrot.slane %v279, 1
        %v422 = vsel %vm415, %v419, %v421
        %v423 = vrot.slane %v280, 1
        %v424 = vsel %vm415, %v421, %v423
        %v425 = vrot.slane %v281, 1
        %v426 = vsel %vm415, %v423, %v425
        %vm429 = vcmask 1041408
        %v430 = vrot.slane %v283, 6
        %v431 = vrot.slane %v284, 6
        %v432 = vsel %vm429, %v430, %v431
        %vm433 = vcmask 48128
        %v434 = vsel %vm433, %v418, 0
        %v436 = vsel %vm433, %v420, 0
        %v438 = vsel %vm433, %v422, 0
        %v440 = vsel %vm433, %v424, 0
        %v442 = vsel %vm433, %v426, 0
        %v444 = vsel %vm433, %v425, 0
        %vm446 = vcmask 1045504
        %v447 = vsel %vm446, %v432, 0
        %449 = vmatprep.subr.mxu0 0.0
        %450 = vmatpush1.msra.mxu0 %v447
        %451 = vmatprep.subr.mxu0 0.0
        %452 = vmatpush1.msra.mxu0 0.0
        %453 = vmatprep.subr.mxu0 0.0
        %454 = vmatpush1.msra.mxu0 0.0
        %455 = vmatprep.subr.mxu0 0.0
        %456 = vmatpush1.msra.mxu0 0.0
        %457 = vmatprep.subr.mxu0 0.0
        %458 = vmatpush1.msra.mxu0 0.0
        %459 = vmatprep.subr.mxu0 0.0
        %460 = vmatpush1.msra.mxu0 0.0
        %461 = vmatprep.subr.mxu0 0.0
        %462 = vmatpush1.msra.mxu0 0.0
        %463 = vmatprep.subr.mxu0 0.0
        %464 = vmatpush1.msra.mxu0 0.0
        %465 = vmatprep.subr.mxu0 0.0
        %466 = vmatpush1.msra.mxu0 0.0
        %467 = vmatprep.subr.mxu0 0.0
        %468 = vmatpush1.msra.mxu0 0.0
        %469 = vmatprep.subr.mxu0 0.0
        %470 = vmatpush1.msra.mxu0 0.0
        %471 = vmatprep.subr.mxu0 0.0
        %472 = vmatpush1.msra.mxu0 0.0
        %473 = vmatprep.subr.mxu0 0.0
        %474 = vmatpush1.msra.mxu0 0.0
        %475 = vmatprep.subr.mxu0 0.0
        %476 = vmatpush1.msra.mxu0 0.0
        %477 = vmatprep.subr.mxu0 0.0
        %478 = vmatpush1.msra.mxu0 0.0
        %479 = vmatprep.subr.mxu0 0.0
        %480 = vmatpush1.msra.mxu0 0.0
        %481 = vmatprep.subr.mxu0 0.0
        %482 = vmatpush1.msra.mxu0 0.0
        %483 = vmatprep.subr.mxu0 0.0
        %484 = vmatpush1.msra.mxu0 0.0
        %485 = vmatprep.subr.mxu0 0.0
        %486 = vmatpush1.msra.mxu0 0.0
        %487 = vmatprep.subr.mxu0 0.0
        %488 = vmatpush1.msra.mxu0 0.0
        %489 = vmatprep.subr.mxu0 0.0
        %490 = vmatpush1.msra.mxu0 0.0
        %491 = vmatprep.subr.mxu0 0.0
        %492 = vmatpush1.msra.mxu0 0.0
        %493 = vmatprep.subr.mxu0 0.0
        %494 = vmatpush1.msra.mxu0 0.0
        %495 = vmatprep.subr.mxu0 0.0
        %496 = vmatpush1.msra.mxu0 0.0
        %497 = vmatprep.subr.mxu0 0.0
        %498 = vmatpush1.msra.mxu0 0.0
        %499 = vmatprep.subr.mxu0 0.0
        %500 = vmatpush1.msra.mxu0 0.0
        %501 = vmatprep.subr.mxu0 0.0
        %502 = vmatpush1.msra.mxu0 0.0
        %503 = vmatprep.subr.mxu0 0.0
        %504 = vmatpush1.msra.mxu0 0.0
        %505 = vmatprep.subr.mxu0 0.0
        %506 = vmatpush1.msra.mxu0 0.0
        %507 = vmatprep.subr.mxu0 0.0
        %508 = vmatpush1.msra.mxu0 0.0
        %509 = vmatprep.subr.mxu0 0.0
        %510 = vmatpush1.msra.mxu0 0.0
        %511 = vmatprep.subr.mxu0 0.0
        %512 = vmatpush1.msra.mxu0 0.0
        %513 = vmatprep.mubr.f32.mxu0 0.0
        %514 = vmatmul.mubr.f32.gmra.mrb[0].mxu0 %v434
        %v515 = vpop.f32.mrb[0].mxu0
        %v516 = vadd.f32 0.0, %v515
        %v517 = vpop.f32.mrb[0].mxu0
        %518 = vmatprep.mubr.f32.mxu0 0.0
        %519 = vmatmul.mubr.f32.gmra.mrb[0].mxu0 %v436
        %v520 = vpop.f32.mrb[0].mxu0
        %v521 = vadd.f32 0.0, %v520
        %v522 = vpop.f32.mrb[0].mxu0
        %523 = vmatprep.mubr.f32.mxu0 0.0
        %524 = vmatmul.mubr.f32.gmra.mrb[0].mxu0 %v438
        %v525 = vpop.f32.mrb[0].mxu0
        %v526 = vadd.f32 0.0, %v525
        %v527 = vpop.f32.mrb[0].mxu0
        %528 = vmatprep.mubr.f32.mxu0 0.0
        %529 = vmatmul.mubr.f32.gmra.mrb[0].mxu0 %v440
        %v530 = vpop.f32.mrb[0].mxu0
        %v531 = vadd.f32 0.0, %v530
        %v532 = vpop.f32.mrb[0].mxu0
        %533 = vmatprep.mubr.f32.mxu0 0.0
        %534 = vmatmul.mubr.f32.gmra.mrb[0].mxu0 %v442
        %v535 = vpop.f32.mrb[0].mxu0
        %v536 = vadd.f32 0.0, %v535
        %v537 = vpop.f32.mrb[0].mxu0
        %538 = vmatprep.mubr.f32.mxu0 0.0
        %539 = vmatmul.mubr.f32.gmra.mrb[0].mxu0 %v444
        %v540 = vpop.f32.mrb[0].mxu0
        %v541 = vadd.f32 0.0, %v540
        %v542 = vpop.f32.mrb[0].mxu0
        %543 = vdwg.mxu0
        %v544 = vsel %vm433, %v276, 0
        %v546 = vsel %vm433, %v277, 0
        %v548 = vsel %vm433, %v278, 0
        %v550 = vsel %vm433, %v279, 0
        %v552 = vsel %vm433, %v280, 0
        %v554 = vsel %vm433, %v281, 0
        %v556 = vsel %vm446, %v283, 0
        %558 = vmatprep.subr.mxu0 0.0
        %559 = vmatpush1.msra.mxu0 %v556
        %560 = vmatprep.subr.mxu0 0.0
        %561 = vmatpush1.msra.mxu0 0.0
        %562 = vmatprep.subr.mxu0 0.0
        %563 = vmatpush1.msra.mxu0 0.0
        %564 = vmatprep.subr.mxu0 0.0
        %565 = vmatpush1.msra.mxu0 0.0
        %566 = vmatprep.subr.mxu0 0.0
        %567 = vmatpush1.msra.mxu0 0.0
        %568 = vmatprep.subr.mxu0 0.0
        %569 = vmatpush1.msra.mxu0 0.0
        %570 = vmatprep.subr.mxu0 0.0
        %571 = vmatpush1.msra.mxu0 0.0
        %572 = vmatprep.subr.mxu0 0.0
        %573 = vmatpush1.msra.mxu0 0.0
        %574 = vmatprep.subr.mxu0 0.0
        %575 = vmatpush1.msra.mxu0 0.0
        %576 = vmatprep.subr.mxu0 0.0
        %577 = vmatpush1.msra.mxu0 0.0
        %578 = vmatprep.subr.mxu0 0.0
        %579 = vmatpush1.msra.mxu0 0.0
        %580 = vmatprep.subr.mxu0 0.0
        %581 = vmatpush1.msra.mxu0 0.0
        %582 = vmatprep.subr.mxu0 0.0
        %583 = vmatpush1.msra.mxu0 0.0
        %584 = vmatprep.subr.mxu0 0.0
        %585 = vmatpush1.msra.mxu0 0.0
        %586 = vmatprep.subr.mxu0 0.0
        %587 = vmatpush1.msra.mxu0 0.0
        %588 = vmatprep.subr.mxu0 0.0
        %589 = vmatpush1.msra.mxu0 0.0
        %590 = vmatprep.subr.mxu0 0.0
        %591 = vmatpush1.msra.mxu0 0.0
        %592 = vmatprep.subr.mxu0 0.0
        %593 = vmatpush1.msra.mxu0 0.0
        %594 = vmatprep.subr.mxu0 0.0
        %595 = vmatpush1.msra.mxu0 0.0
        %596 = vmatprep.subr.mxu0 0.0
        %597 = vmatpush1.msra.mxu0 0.0
        %598 = vmatprep.subr.mxu0 0.0
        %599 = vmatpush1.msra.mxu0 0.0
        %600 = vmatprep.subr.mxu0 0.0
        %601 = vmatpush1.msra.mxu0 0.0
        %602 = vmatprep.subr.mxu0 0.0
        %603 = vmatpush1.msra.mxu0 0.0
        %604 = vmatprep.subr.mxu0 0.0
        %605 = vmatpush1.msra.mxu0 0.0
        %606 = vmatprep.subr.mxu0 0.0
        %607 = vmatpush1.msra.mxu0 0.0
        %608 = vmatprep.subr.mxu0 0.0
        %609 = vmatpush1.msra.mxu0 0.0
        %610 = vmatprep.subr.mxu0 0.0
        %611 = vmatpush1.msra.mxu0 0.0
        %612 = vmatprep.subr.mxu0 0.0
        %613 = vmatpush1.msra.mxu0 0.0
        %614 = vmatprep.subr.mxu0 0.0
        %615 = vmatpush1.msra.mxu0 0.0
        %616 = vmatprep.subr.mxu0 0.0
        %617 = vmatpush1.msra.mxu0 0.0
        %618 = vmatprep.subr.mxu0 0.0
        %619 = vmatpush1.msra.mxu0 0.0
        %620 = vmatprep.subr.mxu0 0.0
        %621 = vmatpush1.msra.mxu0 0.0
        %622 = vmatprep.mubr.f32.mxu0 0.0
        %623 = vmatmul.mubr.f32.gmra.mrb[0].mxu0 %v544
        %v624 = vpop.f32.mrb[0].mxu0
        %v625 = vadd.f32 %v516, %v624
        %v626 = vpop.f32.mrb[0].mxu0
        %627 = vmatprep.mubr.f32.mxu0 0.0
        %628 = vmatmul.mubr.f32.gmra.mrb[0].mxu0 %v546
        %v629 = vpop.f32.mrb[0].mxu0
        %v630 = vadd.f32 %v521, %v629
        %v631 = vpop.f32.mrb[0].mxu0
        %632 = vmatprep.mubr.f32.mxu0 0.0
        %633 = vmatmul.mubr.f32.gmra.mrb[0].mxu0 %v548
        %v634 = vpop.f32.mrb[0].mxu0
        %v635 = vadd.f32 %v526, %v634
        %v636 = vpop.f32.mrb[0].mxu0
        %637 = vmatprep.mubr.f32.mxu0 0.0
        %638 = vmatmul.mubr.f32.gmra.mrb[0].mxu0 %v550
        %v639 = vpop.f32.mrb[0].mxu0
        %v640 = vadd.f32 %v531, %v639
        %v641 = vpop.f32.mrb[0].mxu0
        %642 = vmatprep.mubr.f32.mxu0 0.0
        %643 = vmatmul.mubr.f32.gmra.mrb[0].mxu0 %v552
        %v644 = vpop.f32.mrb[0].mxu0
        %v645 = vadd.f32 %v536, %v644
        %v646 = vpop.f32.mrb[0].mxu0
        %647 = vmatprep.mubr.f32.mxu0 0.0
        %648 = vmatmul.mubr.f32.gmra.mrb[0].mxu0 %v554
        %v649 = vpop.f32.mrb[0].mxu0
        %v650 = vadd.f32 %v541, %v649
        %v651 = vpop.f32.mrb[0].mxu0
        %652 = vdwg.mxu0
        %v653 = vrot.slane %v276, 2
        %v654 = vrot.slane %v277, 2
        %v655 = vsel %vm446, %v653, %v654
        %v656 = vrot.slane %v278, 2
        %v657 = vsel %vm446, %v654, %v656
        %v658 = vrot.slane %v279, 2
        %v659 = vsel %vm446, %v656, %v658
        %v660 = vrot.slane %v280, 2
        %v661 = vsel %vm446, %v658, %v660
        %v662 = vrot.slane %v281, 2
        %v663 = vsel %vm446, %v660, %v662
        %vm665 = vcmask 1043456
        %v666 = vrot.slane %v284, 4
        %v667 = vrot.slane %v285, 4
        %v668 = vsel %vm665, %v666, %v667
        %v669 = vsel %vm433, %v655, 0
        %v671 = vsel %vm433, %v657, 0
        %v673 = vsel %vm433, %v659, 0
        %v675 = vsel %vm433, %v661, 0
        %v677 = vsel %vm433, %v663, 0
        %v679 = vsel %vm433, %v662, 0
        %v681 = vsel %vm446, %v668, 0
        %683 = vmatprep.subr.mxu0 0.0
        %684 = vmatpush1.msra.mxu0 %v681
        %685 = vmatprep.subr.mxu0 0.0
        %686 = vmatpush1.msra.mxu0 0.0
        %687 = vmatprep.subr.mxu0 0.0
        %688 = vmatpush1.msra.mxu0 0.0
        %689 = vmatprep.subr.mxu0 0.0
        %690 = vmatpush1.msra.mxu0 0.0
        %691 = vmatprep.subr.mxu0 0.0
        %692 = vmatpush1.msra.mxu0 0.0
        %693 = vmatprep.subr.mxu0 0.0
        %694 = vmatpush1.msra.mxu0 0.0
        %695 = vmatprep.subr.mxu0 0.0
        %696 = vmatpush1.msra.mxu0 0.0
        %697 = vmatprep.subr.mxu0 0.0
        %698 = vmatpush1.msra.mxu0 0.0
        %699 = vmatprep.subr.mxu0 0.0
        %700 = vmatpush1.msra.mxu0 0.0
        %701 = vmatprep.subr.mxu0 0.0
        %702 = vmatpush1.msra.mxu0 0.0
        %703 = vmatprep.subr.mxu0 0.0
        %704 = vmatpush1.msra.mxu0 0.0
        %705 = vmatprep.subr.mxu0 0.0
        %706 = vmatpush1.msra.mxu0 0.0
        %707 = vmatprep.subr.mxu0 0.0
        %708 = vmatpush1.msra.mxu0 0.0
        %709 = vmatprep.subr.mxu0 0.0
        %710 = vmatpush1.msra.mxu0 0.0
        %711 = vmatprep.subr.mxu0 0.0
        %712 = vmatpush1.msra.mxu0 0.0
        %713 = vmatprep.subr.mxu0 0.0
        %714 = vmatpush1.msra.mxu0 0.0
        %715 = vmatprep.subr.mxu0 0.0
        %716 = vmatpush1.msra.mxu0 0.0
        %717 = vmatprep.subr.mxu0 0.0
        %718 = vmatpush1.msra.mxu0 0.0
        %719 = vmatprep.subr.mxu0 0.0
        %720 = vmatpush1.msra.mxu0 0.0
        %721 = vmatprep.subr.mxu0 0.0
        %722 = vmatpush1.msra.mxu0 0.0
        %723 = vmatprep.subr.mxu0 0.0
        %724 = vmatpush1.msra.mxu0 0.0
        %725 = vmatprep.subr.mxu0 0.0
        %726 = vmatpush1.msra.mxu0 0.0
        %727 = vmatprep.subr.mxu0 0.0
        %728 = vmatpush1.msra.mxu0 0.0
        %729 = vmatprep.subr.mxu0 0.0
        %730 = vmatpush1.msra.mxu0 0.0
        %731 = vmatprep.subr.mxu0 0.0
        %732 = vmatpush1.msra.mxu0 0.0
        %733 = vmatprep.subr.mxu0 0.0
        %734 = vmatpush1.msra.mxu0 0.0
        %735 = vmatprep.subr.mxu0 0.0
        %736 = vmatpush1.msra.mxu0 0.0
        %737 = vmatprep.subr.mxu0 0.0
        %738 = vmatpush1.msra.mxu0 0.0
        %739 = vmatprep.subr.mxu0 0.0
        %740 = vmatpush1.msra.mxu0 0.0
        %741 = vmatprep.subr.mxu0 0.0
        %742 = vmatpush1.msra.mxu0 0.0
        %743 = vmatprep.subr.mxu0 0.0
        %744 = vmatpush1.msra.mxu0 0.0
        %745 = vmatprep.subr.mxu0 0.0
        %746 = vmatpush1.msra.mxu0 0.0
        %747 = vmatprep.mubr.f32.mxu0 0.0
        %748 = vmatmul.mubr.f32.gmra.mrb[0].mxu0 %v669
        %v749 = vpop.f32.mrb[0].mxu0
        %v750 = vadd.f32 0.0, %v749
        %v751 = vpop.f32.mrb[0].mxu0
        %752 = vmatprep.mubr.f32.mxu0 0.0
        %753 = vmatmul.mubr.f32.gmra.mrb[0].mxu0 %v671
        %v754 = vpop.f32.mrb[0].mxu0
        %v755 = vadd.f32 0.0, %v754
        %v756 = vpop.f32.mrb[0].mxu0
        %757 = vmatprep.mubr.f32.mxu0 0.0
        %758 = vmatmul.mubr.f32.gmra.mrb[0].mxu0 %v673
        %v759 = vpop.f32.mrb[0].mxu0
        %v760 = vadd.f32 0.0, %v759
        %v761 = vpop.f32.mrb[0].mxu0
        %762 = vmatprep.mubr.f32.mxu0 0.0
        %763 = vmatmul.mubr.f32.gmra.mrb[0].mxu0 %v675
        %v764 = vpop.f32.mrb[0].mxu0
        %v765 = vadd.f32 0.0, %v764
        %v766 = vpop.f32.mrb[0].mxu0
        %767 = vmatprep.mubr.f32.mxu0 0.0
        %768 = vmatmul.mubr.f32.gmra.mrb[0].mxu0 %v677
        %v769 = vpop.f32.mrb[0].mxu0
        %v770 = vadd.f32 0.0, %v769
        %v771 = vpop.f32.mrb[0].mxu0
        %772 = vmatprep.mubr.f32.mxu0 0.0
        %773 = vmatmul.mubr.f32.gmra.mrb[0].mxu0 %v679
        %v774 = vpop.f32.mrb[0].mxu0
        %v775 = vadd.f32 0.0, %v774
        %v776 = vpop.f32.mrb[0].mxu0
        %777 = vdwg.mxu0
        %v778 = vadd.f32 %v625, %v750
        %v779 = vadd.f32 %v630, %v755
        %v780 = vadd.f32 %v635, %v760
        %v781 = vadd.f32 %v640, %v765
        %v782 = vadd.f32 %v645, %v770
        %v783 = vadd.f32 %v650, %v775
        %vm785 = vcmask 1044480
        %v786 = vrot.slane %v276, 3
        %v787 = vrot.slane %v277, 3
        %v788 = vsel %vm785, %v786, %v787
        %v789 = vrot.slane %v278, 3
        %v790 = vsel %vm785, %v787, %v789
        %v791 = vrot.slane %v279, 3
        %v792 = vsel %vm785, %v789, %v791
        %v793 = vrot.slane %v280, 3
        %v794 = vsel %vm785, %v791, %v793
        %v795 = vrot.slane %v281, 3
        %v796 = vsel %vm785, %v793, %v795
        %v797 = vrot.slane %v282, 3
        %v798 = vsel %vm785, %v795, %v797
        %v799 = vrot.slane %v285, 2
        %v800 = vsel %vm433, %v788, 0
        %v802 = vsel %vm433, %v790, 0
        %v804 = vsel %vm433, %v792, 0
        %v806 = vsel %vm433, %v794, 0
        %v808 = vsel %vm433, %v796, 0
        %v810 = vsel %vm433, %v798, 0
        %v812 = vsel %vm446, %v799, 0
        %814 = vmatprep.subr.mxu0 0.0
        %815 = vmatpush1.msra.mxu0 %v812
        %816 = vmatprep.subr.mxu0 0.0
        %817 = vmatpush1.msra.mxu0 0.0
        %818 = vmatprep.subr.mxu0 0.0
        %819 = vmatpush1.msra.mxu0 0.0
        %820 = vmatprep.subr.mxu0 0.0
        %821 = vmatpush1.msra.mxu0 0.0
        %822 = vmatprep.subr.mxu0 0.0
        %823 = vmatpush1.msra.mxu0 0.0
        %824 = vmatprep.subr.mxu0 0.0
        %825 = vmatpush1.msra.mxu0 0.0
        %826 = vmatprep.subr.mxu0 0.0
        %827 = vmatpush1.msra.mxu0 0.0
        %828 = vmatprep.subr.mxu0 0.0
        %829 = vmatpush1.msra.mxu0 0.0
        %830 = vmatprep.subr.mxu0 0.0
        %831 = vmatpush1.msra.mxu0 0.0
        %832 = vmatprep.subr.mxu0 0.0
        %833 = vmatpush1.msra.mxu0 0.0
        %834 = vmatprep.subr.mxu0 0.0
        %835 = vmatpush1.msra.mxu0 0.0
        %836 = vmatprep.subr.mxu0 0.0
        %837 = vmatpush1.msra.mxu0 0.0
        %838 = vmatprep.subr.mxu0 0.0
        %839 = vmatpush1.msra.mxu0 0.0
        %840 = vmatprep.subr.mxu0 0.0
        %841 = vmatpush1.msra.mxu0 0.0
        %842 = vmatprep.subr.mxu0 0.0
        %843 = vmatpush1.msra.mxu0 0.0
        %844 = vmatprep.subr.mxu0 0.0
        %845 = vmatpush1.msra.mxu0 0.0
        %846 = vmatprep.subr.mxu0 0.0
        %847 = vmatpush1.msra.mxu0 0.0
        %848 = vmatprep.subr.mxu0 0.0
        %849 = vmatpush1.msra.mxu0 0.0
        %850 = vmatprep.subr.mxu0 0.0
        %851 = vmatpush1.msra.mxu0 0.0
        %852 = vmatprep.subr.mxu0 0.0
        %853 = vmatpush1.msra.mxu0 0.0
        %854 = vmatprep.subr.mxu0 0.0
        %855 = vmatpush1.msra.mxu0 0.0
        %856 = vmatprep.subr.mxu0 0.0
        %857 = vmatpush1.msra.mxu0 0.0
        %858 = vmatprep.subr.mxu0 0.0
        %859 = vmatpush1.msra.mxu0 0.0
        %860 = vmatprep.subr.mxu0 0.0
        %861 = vmatpush1.msra.mxu0 0.0
        %862 = vmatprep.subr.mxu0 0.0
        %863 = vmatpush1.msra.mxu0 0.0
        %864 = vmatprep.subr.mxu0 0.0
        %865 = vmatpush1.msra.mxu0 0.0
        %866 = vmatprep.subr.mxu0 0.0
        %867 = vmatpush1.msra.mxu0 0.0
        %868 = vmatprep.subr.mxu0 0.0
        %869 = vmatpush1.msra.mxu0 0.0
        %870 = vmatprep.subr.mxu0 0.0
        %871 = vmatpush1.msra.mxu0 0.0
        %872 = vmatprep.subr.mxu0 0.0
        %873 = vmatpush1.msra.mxu0 0.0
        %874 = vmatprep.subr.mxu0 0.0
        %875 = vmatpush1.msra.mxu0 0.0
        %876 = vmatprep.subr.mxu0 0.0
        %877 = vmatpush1.msra.mxu0 0.0
        %878 = vmatprep.mubr.f32.mxu0 0.0
        %879 = vmatmul.mubr.f32.gmra.mrb[0].mxu0 %v800
        %v880 = vpop.f32.mrb[0].mxu0
        %v881 = vadd.f32 0.0, %v880
        %v882 = vpop.f32.mrb[0].mxu0
        %883 = vmatprep.mubr.f32.mxu0 0.0
        %884 = vmatmul.mubr.f32.gmra.mrb[0].mxu0 %v802
        %v885 = vpop.f32.mrb[0].mxu0
        %v886 = vadd.f32 0.0, %v885
        %v887 = vpop.f32.mrb[0].mxu0
        %888 = vmatprep.mubr.f32.mxu0 0.0
        %889 = vmatmul.mubr.f32.gmra.mrb[0].mxu0 %v804
        %v890 = vpop.f32.mrb[0].mxu0
        %v891 = vadd.f32 0.0, %v890
        %v892 = vpop.f32.mrb[0].mxu0
        %893 = vmatprep.mubr.f32.mxu0 0.0
        %894 = vmatmul.mubr.f32.gmra.mrb[0].mxu0 %v806
        %v895 = vpop.f32.mrb[0].mxu0
        %v896 = vadd.f32 0.0, %v895
        %v897 = vpop.f32.mrb[0].mxu0
        %898 = vmatprep.mubr.f32.mxu0 0.0
        %899 = vmatmul.mubr.f32.gmra.mrb[0].mxu0 %v808
        %v900 = vpop.f32.mrb[0].mxu0
        %v901 = vadd.f32 0.0, %v900
        %v902 = vpop.f32.mrb[0].mxu0
        %903 = vmatprep.mubr.f32.mxu0 0.0
        %904 = vmatmul.mubr.f32.gmra.mrb[0].mxu0 %v810
        %v905 = vpop.f32.mrb[0].mxu0
        %v906 = vadd.f32 0.0, %v905
        %v907 = vpop.f32.mrb[0].mxu0
        %908 = vdwg.mxu0
        %v909 = vadd.f32 %v778, %v881
        %v910 = vadd.f32 %v779, %v886
        %v911 = vadd.f32 %v780, %v891
        %v912 = vadd.f32 %v781, %v896
        %v913 = vadd.f32 %v782, %v901
        %v914 = vadd.f32 %v783, %v906
        %v915 = vrot.slane %v276, 4
        %v916 = vrot.slane %v277, 4
        %v917 = vsel %vm665, %v915, %v916
        %v918 = vrot.slane %v278, 4
        %v919 = vsel %vm665, %v916, %v918
        %v920 = vrot.slane %v279, 4
        %v921 = vsel %vm665, %v918, %v920
        %v922 = vrot.slane %v280, 4
        %v923 = vsel %vm665, %v920, %v922
        %v924 = vrot.slane %v281, 4
        %v925 = vsel %vm665, %v922, %v924
        %v926 = vrot.slane %v282, 4
        %v927 = vsel %vm665, %v924, %v926
        %v928 = vsel %vm433, %v917, 0
        %v930 = vsel %vm433, %v919, 0
        %v932 = vsel %vm433, %v921, 0
        %v934 = vsel %vm433, %v923, 0
        %v936 = vsel %vm433, %v925, 0
        %v938 = vsel %vm433, %v927, 0
        %v941 = vsel %vm446, %v286, 0
        %943 = vmatprep.subr.mxu0 0.0
        %944 = vmatpush1.msra.mxu0 %v941
        %945 = vmatprep.subr.mxu0 0.0
        %946 = vmatpush1.msra.mxu0 0.0
        %947 = vmatprep.subr.mxu0 0.0
        %948 = vmatpush1.msra.mxu0 0.0
        %949 = vmatprep.subr.mxu0 0.0
        %950 = vmatpush1.msra.mxu0 0.0
        %951 = vmatprep.subr.mxu0 0.0
        %952 = vmatpush1.msra.mxu0 0.0
        %953 = vmatprep.subr.mxu0 0.0
        %954 = vmatpush1.msra.mxu0 0.0
        %955 = vmatprep.subr.mxu0 0.0
        %956 = vmatpush1.msra.mxu0 0.0
        %957 = vmatprep.subr.mxu0 0.0
        %958 = vmatpush1.msra.mxu0 0.0
        %959 = vmatprep.subr.mxu0 0.0
        %960 = vmatpush1.msra.mxu0 0.0
        %961 = vmatprep.subr.mxu0 0.0
        %962 = vmatpush1.msra.mxu0 0.0
        %963 = vmatprep.subr.mxu0 0.0
        %964 = vmatpush1.msra.mxu0 0.0
        %965 = vmatprep.subr.mxu0 0.0
        %966 = vmatpush1.msra.mxu0 0.0
        %967 = vmatprep.subr.mxu0 0.0
        %968 = vmatpush1.msra.mxu0 0.0
        %969 = vmatprep.subr.mxu0 0.0
        %970 = vmatpush1.msra.mxu0 0.0
        %971 = vmatprep.subr.mxu0 0.0
        %972 = vmatpush1.msra.mxu0 0.0
        %973 = vmatprep.subr.mxu0 0.0
        %974 = vmatpush1.msra.mxu0 0.0
        %975 = vmatprep.subr.mxu0 0.0
        %976 = vmatpush1.msra.mxu0 0.0
        %977 = vmatprep.subr.mxu0 0.0
        %978 = vmatpush1.msra.mxu0 0.0
        %979 = vmatprep.subr.mxu0 0.0
        %980 = vmatpush1.msra.mxu0 0.0
        %981 = vmatprep.subr.mxu0 0.0
        %982 = vmatpush1.msra.mxu0 0.0
        %983 = vmatprep.subr.mxu0 0.0
        %984 = vmatpush1.msra.mxu0 0.0
        %985 = vmatprep.subr.mxu0 0.0
        %986 = vmatpush1.msra.mxu0 0.0
        %987 = vmatprep.subr.mxu0 0.0
        %988 = vmatpush1.msra.mxu0 0.0
        %989 = vmatprep.subr.mxu0 0.0
        %990 = vmatpush1.msra.mxu0 0.0
        %991 = vmatprep.subr.mxu0 0.0
        %992 = vmatpush1.msra.mxu0 0.0
        %993 = vmatprep.subr.mxu0 0.0
        %994 = vmatpush1.msra.mxu0 0.0
        %995 = vmatprep.subr.mxu0 0.0
        %996 = vmatpush1.msra.mxu0 0.0
        %997 = vmatprep.subr.mxu0 0.0
        %998 = vmatpush1.msra.mxu0 0.0
        %999 = vmatprep.subr.mxu0 0.0
        %1000 = vmatpush1.msra.mxu0 0.0
        %1001 = vmatprep.subr.mxu0 0.0
        %1002 = vmatpush1.msra.mxu0 0.0
        %1003 = vmatprep.subr.mxu0 0.0
        %1004 = vmatpush1.msra.mxu0 0.0
        %1005 = vmatprep.subr.mxu0 0.0
        %1006 = vmatpush1.msra.mxu0 0.0
        %1007 = vmatprep.mubr.f32.mxu0 0.0
        %1008 = vmatmul.mubr.f32.gmra.mrb[0].mxu0 %v928
        %v1009 = vpop.f32.mrb[0].mxu0
        %v1010 = vadd.f32 0.0, %v1009
        %v1011 = vpop.f32.mrb[0].mxu0
        %1012 = vmatprep.mubr.f32.mxu0 0.0
        %1013 = vmatmul.mubr.f32.gmra.mrb[0].mxu0 %v930
        %v1014 = vpop.f32.mrb[0].mxu0
        %v1015 = vadd.f32 0.0, %v1014
        %v1016 = vpop.f32.mrb[0].mxu0
        %1017 = vmatprep.mubr.f32.mxu0 0.0
        %1018 = vmatmul.mubr.f32.gmra.mrb[0].mxu0 %v932
        %v1019 = vpop.f32.mrb[0].mxu0
        %v1020 = vadd.f32 0.0, %v1019
        %v1021 = vpop.f32.mrb[0].mxu0
        %1022 = vmatprep.mubr.f32.mxu0 0.0
        %1023 = vmatmul.mubr.f32.gmra.mrb[0].mxu0 %v934
        %v1024 = vpop.f32.mrb[0].mxu0
        %v1025 = vadd.f32 0.0, %v1024
        %v1026 = vpop.f32.mrb[0].mxu0
        %1027 = vmatprep.mubr.f32.mxu0 0.0
        %1028 = vmatmul.mubr.f32.gmra.mrb[0].mxu0 %v936
        %v1029 = vpop.f32.mrb[0].mxu0
        %v1030 = vadd.f32 0.0, %v1029
        %v1031 = vpop.f32.mrb[0].mxu0
        %1032 = vmatprep.mubr.f32.mxu0 0.0
        %1033 = vmatmul.mubr.f32.gmra.mrb[0].mxu0 %v938
        %v1034 = vpop.f32.mrb[0].mxu0
        %v1035 = vadd.f32 0.0, %v1034
        %v1036 = vpop.f32.mrb[0].mxu0
        %1037 = vdwg.mxu0
        %v1038 = vadd.f32 %v909, %v1010
        %v1039 = vadd.f32 %v910, %v1015
        %v1040 = vadd.f32 %v911, %v1020
        %v1041 = vadd.f32 %v912, %v1025
        %v1042 = vadd.f32 %v913, %v1030
        %v1043 = vadd.f32 %v914, %v1035
        %v1044 = vlaneseq
        %v1045 = vshrl.u32 %v1044, 7
        %v1046 = vsub.s32 0, %v1045
        %v1047 = vrot.slane %v351, %v1046
        %v1048 = vadd.f32 %v1038, %v1047
        %v1049 = vadd.f32 %v1039, %v1047
        %v1050 = vadd.f32 %v1040, %v1047
        %v1051 = vadd.f32 %v1041, %v1047
        %v1052 = vadd.f32 %v1042, %v1047
        %v1053 = vadd.f32 %v1043, %v1047
        %v1060 = vrot.slane %v1048, 1
        %v1061 = vrot.slane %v1049, 1
        %v1062 = vsel %vm415, %v1060, %v1061
        %v1063 = vrot.slane %v1050, 1
        %v1064 = vsel %vm415, %v1061, %v1063
        %v1065 = vrot.slane %v1051, 1
        %v1066 = vsel %vm415, %v1063, %v1065
        %v1067 = vrot.slane %v1052, 1
        %v1068 = vsel %vm415, %v1065, %v1067
        %v1069 = vrot.slane %v1053, 1
        %v1070 = vsel %vm415, %v1067, %v1069
        %v1077 = vmax.f32 %v1048, %v1062
        %v1078 = vmax.f32 %v1049, %v1064
        %v1079 = vmax.f32 %v1050, %v1066
        %v1080 = vmax.f32 %v1051, %v1068
        %v1081 = vmax.f32 %v1052, %v1070
        %v1082 = vmax.f32 %v1053, %v1069
        %v1083 = vlaneseq
        %v1084 = vshrl.u32 %v1083, 7
        %v1085 = vadd.s32 %v1084, 8
        %v1086 = vadd.s32 %v1084, 16
        %v1087 = vlaneseq
        %v1088 = vand.u32 %v1087, 127
        %v1089 = vmul.u32 %v1084, 2
        %v1090 = vmul.u32 %v1085, 2
        %v1091 = vmul.u32 %v1086, 2
        %vm1092 = vcmp.eq.s32.totalorder %v1088, %v1089
        %vm1093 = vcmp.eq.s32.totalorder %v1088, %v1090
        %vm1094 = vcmp.eq.s32.totalorder %v1088, %v1091
        %v1095 = vsel %vm1092, 1, 0
        %v1096 = vsel %vm1093, 1, 0
        %v1097 = vsel %vm1094, 1, 0
        %v1098 = vcvt.s32.f32 %v1095
        %v1099 = vcvt.s32.f32 %v1096
        %v1100 = vcvt.s32.f32 %v1097
        %vm1101 = vcmask 367616
        %v1103 = vsel %vm1101, %v1098, 0
        %v1106 = vsel %vm1101, %v1099, 0
        %v1109 = vsel %vm1101, %v1100, 0
        %v1112 = vsel %vm785, %v1082, 0
        %1114 = vmatprep.subr.mxu0 0.0
        %1115 = vmatpush1.msra.mxu0 %v1077
        %1116 = vmatprep.subr.mxu0 0.0
        %1117 = vmatpush1.msra.mxu0 %v1078
        %1118 = vmatprep.subr.mxu0 0.0
        %1119 = vmatpush1.msra.mxu0 %v1079
        %1120 = vmatprep.subr.mxu0 0.0
        %1121 = vmatpush1.msra.mxu0 %v1080
        %1122 = vmatprep.subr.mxu0 0.0
        %1123 = vmatpush1.msra.mxu0 %v1081
        %1124 = vmatprep.subr.mxu0 0.0
        %1125 = vmatpush1.msra.mxu0 %v1112
        %1126 = vmatprep.subr.mxu0 0.0
        %1127 = vmatpush1.msra.mxu0 0.0
        %1128 = vmatprep.subr.mxu0 0.0
        %1129 = vmatpush1.msra.mxu0 0.0
        %1130 = vmatprep.subr.mxu0 0.0
        %1131 = vmatpush1.msra.mxu0 0.0
        %1132 = vmatprep.subr.mxu0 0.0
        %1133 = vmatpush1.msra.mxu0 0.0
        %1134 = vmatprep.subr.mxu0 0.0
        %1135 = vmatpush1.msra.mxu0 0.0
        %1136 = vmatprep.subr.mxu0 0.0
        %1137 = vmatpush1.msra.mxu0 0.0
        %1138 = vmatprep.subr.mxu0 0.0
        %1139 = vmatpush1.msra.mxu0 0.0
        %1140 = vmatprep.subr.mxu0 0.0
        %1141 = vmatpush1.msra.mxu0 0.0
        %1142 = vmatprep.subr.mxu0 0.0
        %1143 = vmatpush1.msra.mxu0 0.0
        %1144 = vmatprep.subr.mxu0 0.0
        %1145 = vmatpush1.msra.mxu0 0.0
        %1146 = vmatprep.subr.mxu0 0.0
        %1147 = vmatpush1.msra.mxu0 0.0
        %1148 = vmatprep.subr.mxu0 0.0
        %1149 = vmatpush1.msra.mxu0 0.0
        %1150 = vmatprep.subr.mxu0 0.0
        %1151 = vmatpush1.msra.mxu0 0.0
        %1152 = vmatprep.subr.mxu0 0.0
        %1153 = vmatpush1.msra.mxu0 0.0
        %1154 = vmatprep.subr.mxu0 0.0
        %1155 = vmatpush1.msra.mxu0 0.0
        %1156 = vmatprep.subr.mxu0 0.0
        %1157 = vmatpush1.msra.mxu0 0.0
        %1158 = vmatprep.subr.mxu0 0.0
        %1159 = vmatpush1.msra.mxu0 0.0
        %1160 = vmatprep.subr.mxu0 0.0
        %1161 = vmatpush1.msra.mxu0 0.0
        %1162 = vmatprep.subr.mxu0 0.0
        %1163 = vmatpush1.msra.mxu0 0.0
        %1164 = vmatprep.subr.mxu0 0.0
        %1165 = vmatpush1.msra.mxu0 0.0
        %1166 = vmatprep.subr.mxu0 0.0
        %1167 = vmatpush1.msra.mxu0 0.0
        %1168 = vmatprep.subr.mxu0 0.0
        %1169 = vmatpush1.msra.mxu0 0.0
        %1170 = vmatprep.subr.mxu0 0.0
        %1171 = vmatpush1.msra.mxu0 0.0
        %1172 = vmatprep.subr.mxu0 0.0
        %1173 = vmatpush1.msra.mxu0 0.0
        %1174 = vmatprep.subr.mxu0 0.0
        %1175 = vmatpush1.msra.mxu0 0.0
        %1176 = vmatprep.subr.mxu0 0.0
        %1177 = vmatpush1.msra.mxu0 0.0
        %1178 = vmatprep.mubr.f32.mxu0 0.0
        %1179 = vmatmul.mubr.f32.gmra.mrb[0].mxu0 %v1103
        %v1180 = vpop.f32.mrb[0].mxu0
        %v1181 = vadd.f32 0.0, %v1180
        %v1182 = vpop.f32.mrb[0].mxu0
        %1183 = vmatprep.mubr.f32.mxu0 0.0
        %1184 = vmatmul.mubr.f32.gmra.mrb[0].mxu0 %v1106
        %v1185 = vpop.f32.mrb[0].mxu0
        %v1186 = vadd.f32 0.0, %v1185
        %v1187 = vpop.f32.mrb[0].mxu0
        %1188 = vmatprep.mubr.f32.mxu0 0.0
        %1189 = vmatmul.mubr.f32.gmra.mrb[0].mxu0 %v1109
        %v1190 = vpop.f32.mrb[0].mxu0
        %v1191 = vadd.f32 0.0, %v1190
        %v1192 = vpop.f32.mrb[0].mxu0
        %1193 = vdwg.mxu0
        %v1194 = vmax.f32 %v1181, 0.0
        %v1195 = vmax.f32 %v1186, 0.0
        %v1196 = vmax.f32 %v1191, 0.0
        %v1200 = vrot.slane %v1194, 1
        %v1201 = vrot.slane %v1195, 1
        %v1202 = vsel %vm415, %v1200, %v1201
        %v1203 = vrot.slane %v1196, 1
        %v1204 = vsel %vm415, %v1201, %v1203
        %vm1205 = vcmask 523264
        %v1206 = vsel %vm1205, %v1202, 0
        %v1208 = vsel %vm1205, %v1204, 0
        %v1210 = vsel %vm1205, %v1203, 0
        %1212 = vmatprep.subr.mxu0 0.0
        %1213 = vmatpush1.msra.mxu0 %v295
        %1214 = vmatprep.subr.mxu0 0.0
        %1215 = vmatpush1.msra.mxu0 %v296
        %1216 = vmatprep.subr.mxu0 0.0
        %1217 = vmatpush1.msra.mxu0 %v297
        %1218 = vmatprep.subr.mxu0 0.0
        %1219 = vmatpush1.msra.mxu0 %v298
        %1220 = vmatprep.subr.mxu0 0.0
        %1221 = vmatpush1.msra.mxu0 %v299
        %1222 = vmatprep.subr.mxu0 0.0
        %1223 = vmatpush1.msra.mxu0 %v300
        %1224 = vmatprep.subr.mxu0 0.0
        %1225 = vmatpush1.msra.mxu0 %v301
        %1226 = vmatprep.subr.mxu0 0.0
        %1227 = vmatpush1.msra.mxu0 %v302
        %1228 = vmatprep.subr.mxu0 0.0
        %1229 = vmatpush1.msra.mxu0 0.0
        %1230 = vmatprep.subr.mxu0 0.0
        %1231 = vmatpush1.msra.mxu0 0.0
        %1232 = vmatprep.subr.mxu0 0.0
        %1233 = vmatpush1.msra.mxu0 0.0
        %1234 = vmatprep.subr.mxu0 0.0
        %1235 = vmatpush1.msra.mxu0 0.0
        %1236 = vmatprep.subr.mxu0 0.0
        %1237 = vmatpush1.msra.mxu0 0.0
        %1238 = vmatprep.subr.mxu0 0.0
        %1239 = vmatpush1.msra.mxu0 0.0
        %1240 = vmatprep.subr.mxu0 0.0
        %1241 = vmatpush1.msra.mxu0 0.0
        %1242 = vmatprep.subr.mxu0 0.0
        %1243 = vmatpush1.msra.mxu0 0.0
        %1244 = vmatprep.subr.mxu0 0.0
        %1245 = vmatpush1.msra.mxu0 0.0
        %1246 = vmatprep.subr.mxu0 0.0
        %1247 = vmatpush1.msra.mxu0 0.0
        %1248 = vmatprep.subr.mxu0 0.0
        %1249 = vmatpush1.msra.mxu0 0.0
        %1250 = vmatprep.subr.mxu0 0.0
        %1251 = vmatpush1.msra.mxu0 0.0
        %1252 = vmatprep.subr.mxu0 0.0
        %1253 = vmatpush1.msra.mxu0 0.0
        %1254 = vmatprep.subr.mxu0 0.0
        %1255 = vmatpush1.msra.mxu0 0.0
        %1256 = vmatprep.subr.mxu0 0.0
        %1257 = vmatpush1.msra.mxu0 0.0
        %1258 = vmatprep.subr.mxu0 0.0
        %1259 = vmatpush1.msra.mxu0 0.0
        %1260 = vmatprep.subr.mxu0 0.0
        %1261 = vmatpush1.msra.mxu0 0.0
        %1262 = vmatprep.subr.mxu0 0.0
        %1263 = vmatpush1.msra.mxu0 0.0
        %1264 = vmatprep.subr.mxu0 0.0
        %1265 = vmatpush1.msra.mxu0 0.0
        %1266 = vmatprep.subr.mxu0 0.0
        %1267 = vmatpush1.msra.mxu0 0.0
        %1268 = vmatprep.subr.mxu0 0.0
        %1269 = vmatpush1.msra.mxu0 0.0
        %1270 = vmatprep.subr.mxu0 0.0
        %1271 = vmatpush1.msra.mxu0 0.0
        %1272 = vmatprep.subr.mxu0 0.0
        %1273 = vmatpush1.msra.mxu0 0.0
        %1274 = vmatprep.subr.mxu0 0.0
        %1275 = vmatpush1.msra.mxu0 0.0
        %1276 = vmatprep.mubr.f32.mxu0 0.0
        %1277 = vmatmul.mubr.f32.gmra.mrb[0].mxu0 %v1206
        %v1278 = vpop.f32.mrb[0].mxu0
        %v1279 = vadd.f32 0.0, %v1278
        %v1280 = vpop.f32.mrb[0].mxu0
        %1281 = vmatprep.mubr.f32.mxu0 0.0
        %1282 = vmatmul.mubr.f32.gmra.mrb[0].mxu0 %v1208
        %v1283 = vpop.f32.mrb[0].mxu0
        %v1284 = vadd.f32 0.0, %v1283
        %v1285 = vpop.f32.mrb[0].mxu0
        %1286 = vmatprep.mubr.f32.mxu0 0.0
        %1287 = vmatmul.mubr.f32.gmra.mrb[0].mxu0 %v1210
        %v1288 = vpop.f32.mrb[0].mxu0
        %v1289 = vadd.f32 0.0, %v1288
        %v1290 = vpop.f32.mrb[0].mxu0
        %1291 = vdwg.mxu0
        %v1292 = vsel %vm1205, %v1194, 0
        %v1294 = vsel %vm1205, %v1195, 0
        %v1296 = vsel %vm1205, %v1196, 0
        %1298 = vmatprep.subr.mxu0 0.0
        %1299 = vmatpush1.msra.mxu0 %v287
        %1300 = vmatprep.subr.mxu0 0.0
        %1301 = vmatpush1.msra.mxu0 %v288
        %1302 = vmatprep.subr.mxu0 0.0
        %1303 = vmatpush1.msra.mxu0 %v289
        %1304 = vmatprep.subr.mxu0 0.0
        %1305 = vmatpush1.msra.mxu0 %v290
        %1306 = vmatprep.subr.mxu0 0.0
        %1307 = vmatpush1.msra.mxu0 %v291
        %1308 = vmatprep.subr.mxu0 0.0
        %1309 = vmatpush1.msra.mxu0 %v292
        %1310 = vmatprep.subr.mxu0 0.0
        %1311 = vmatpush1.msra.mxu0 %v293
        %1312 = vmatprep.subr.mxu0 0.0
        %1313 = vmatpush1.msra.mxu0 %v294
        %1314 = vmatprep.subr.mxu0 0.0
        %1315 = vmatpush1.msra.mxu0 0.0
        %1316 = vmatprep.subr.mxu0 0.0
        %1317 = vmatpush1.msra.mxu0 0.0
        %1318 = vmatprep.subr.mxu0 0.0
        %1319 = vmatpush1.msra.mxu0 0.0
        %1320 = vmatprep.subr.mxu0 0.0
        %1321 = vmatpush1.msra.mxu0 0.0
        %1322 = vmatprep.subr.mxu0 0.0
        %1323 = vmatpush1.msra.mxu0 0.0
        %1324 = vmatprep.subr.mxu0 0.0
        %1325 = vmatpush1.msra.mxu0 0.0
        %1326 = vmatprep.subr.mxu0 0.0
        %1327 = vmatpush1.msra.mxu0 0.0
        %1328 = vmatprep.subr.mxu0 0.0
        %1329 = vmatpush1.msra.mxu0 0.0
        %1330 = vmatprep.subr.mxu0 0.0
        %1331 = vmatpush1.msra.mxu0 0.0
        %1332 = vmatprep.subr.mxu0 0.0
        %1333 = vmatpush1.msra.mxu0 0.0
        %1334 = vmatprep.subr.mxu0 0.0
        %1335 = vmatpush1.msra.mxu0 0.0
        %1336 = vmatprep.subr.mxu0 0.0
        %1337 = vmatpush1.msra.mxu0 0.0
        %1338 = vmatprep.subr.mxu0 0.0
        %1339 = vmatpush1.msra.mxu0 0.0
        %1340 = vmatprep.subr.mxu0 0.0
        %1341 = vmatpush1.msra.mxu0 0.0
        %1342 = vmatprep.subr.mxu0 0.0
        %1343 = vmatpush1.msra.mxu0 0.0
        %1344 = vmatprep.subr.mxu0 0.0
        %1345 = vmatpush1.msra.mxu0 0.0
        %1346 = vmatprep.subr.mxu0 0.0
        %1347 = vmatpush1.msra.mxu0 0.0
        %1348 = vmatprep.subr.mxu0 0.0
        %1349 = vmatpush1.msra.mxu0 0.0
        %1350 = vmatprep.subr.mxu0 0.0
        %1351 = vmatpush1.msra.mxu0 0.0
        %1352 = vmatprep.subr.mxu0 0.0
        %1353 = vmatpush1.msra.mxu0 0.0
        %1354 = vmatprep.subr.mxu0 0.0
        %1355 = vmatpush1.msra.mxu0 0.0
        %1356 = vmatprep.subr.mxu0 0.0
        %1357 = vmatpush1.msra.mxu0 0.0
        %1358 = vmatprep.subr.mxu0 0.0
        %1359 = vmatpush1.msra.mxu0 0.0
        %1360 = vmatprep.subr.mxu0 0.0
        %1361 = vmatpush1.msra.mxu0 0.0
        %1362 = vmatprep.mubr.f32.mxu0 0.0
        %1363 = vmatmul.mubr.f32.gmra.mrb[0].mxu0 %v1292
        %v1364 = vpop.f32.mrb[0].mxu0
        %v1365 = vadd.f32 %v1279, %v1364
        %v1366 = vpop.f32.mrb[0].mxu0
        %1367 = vmatprep.mubr.f32.mxu0 0.0
        %1368 = vmatmul.mubr.f32.gmra.mrb[0].mxu0 %v1294
        %v1369 = vpop.f32.mrb[0].mxu0
        %v1370 = vadd.f32 %v1284, %v1369
        %v1371 = vpop.f32.mrb[0].mxu0
        %1372 = vmatprep.mubr.f32.mxu0 0.0
        %1373 = vmatmul.mubr.f32.gmra.mrb[0].mxu0 %v1296
        %v1374 = vpop.f32.mrb[0].mxu0
        %v1375 = vadd.f32 %v1289, %v1374
        %v1376 = vpop.f32.mrb[0].mxu0
        %1377 = vdwg.mxu0
        %v1378 = vrot.slane %v1194, 2
        %v1379 = vrot.slane %v1195, 2
        %v1380 = vsel %vm446, %v1378, %v1379
        %v1381 = vrot.slane %v1196, 2
        %v1382 = vsel %vm446, %v1379, %v1381
        %v1383 = vsel %vm1205, %v1380, 0
        %v1385 = vsel %vm1205, %v1382, 0
        %v1387 = vsel %vm1205, %v1381, 0
        %1389 = vmatprep.subr.mxu0 0.0
        %1390 = vmatpush1.msra.mxu0 %v303
        %1391 = vmatprep.subr.mxu0 0.0
        %1392 = vmatpush1.msra.mxu0 %v304
        %1393 = vmatprep.subr.mxu0 0.0
        %1394 = vmatpush1.msra.mxu0 %v305
        %1395 = vmatprep.subr.mxu0 0.0
        %1396 = vmatpush1.msra.mxu0 %v306
        %1397 = vmatprep.subr.mxu0 0.0
        %1398 = vmatpush1.msra.mxu0 %v307
        %1399 = vmatprep.subr.mxu0 0.0
        %1400 = vmatpush1.msra.mxu0 %v308
        %1401 = vmatprep.subr.mxu0 0.0
        %1402 = vmatpush1.msra.mxu0 %v309
        %1403 = vmatprep.subr.mxu0 0.0
        %1404 = vmatpush1.msra.mxu0 %v310
        %1405 = vmatprep.subr.mxu0 0.0
        %1406 = vmatpush1.msra.mxu0 0.0
        %1407 = vmatprep.subr.mxu0 0.0
        %1408 = vmatpush1.msra.mxu0 0.0
        %1409 = vmatprep.subr.mxu0 0.0
        %1410 = vmatpush1.msra.mxu0 0.0
        %1411 = vmatprep.subr.mxu0 0.0
        %1412 = vmatpush1.msra.mxu0 0.0
        %1413 = vmatprep.subr.mxu0 0.0
        %1414 = vmatpush1.msra.mxu0 0.0
        %1415 = vmatprep.subr.mxu0 0.0
        %1416 = vmatpush1.msra.mxu0 0.0
        %1417 = vmatprep.subr.mxu0 0.0
        %1418 = vmatpush1.msra.mxu0 0.0
        %1419 = vmatprep.subr.mxu0 0.0
        %1420 = vmatpush1.msra.mxu0 0.0
        %1421 = vmatprep.subr.mxu0 0.0
        %1422 = vmatpush1.msra.mxu0 0.0
        %1423 = vmatprep.subr.mxu0 0.0
        %1424 = vmatpush1.msra.mxu0 0.0
        %1425 = vmatprep.subr.mxu0 0.0
        %1426 = vmatpush1.msra.mxu0 0.0
        %1427 = vmatprep.subr.mxu0 0.0
        %1428 = vmatpush1.msra.mxu0 0.0
        %1429 = vmatprep.subr.mxu0 0.0
        %1430 = vmatpush1.msra.mxu0 0.0
        %1431 = vmatprep.subr.mxu0 0.0
        %1432 = vmatpush1.msra.mxu0 0.0
        %1433 = vmatprep.subr.mxu0 0.0
        %1434 = vmatpush1.msra.mxu0 0.0
        %1435 = vmatprep.subr.mxu0 0.0
        %1436 = vmatpush1.msra.mxu0 0.0
        %1437 = vmatprep.subr.mxu0 0.0
        %1438 = vmatpush1.msra.mxu0 0.0
        %1439 = vmatprep.subr.mxu0 0.0
        %1440 = vmatpush1.msra.mxu0 0.0
        %1441 = vmatprep.subr.mxu0 0.0
        %1442 = vmatpush1.msra.mxu0 0.0
        %1443 = vmatprep.subr.mxu0 0.0
        %1444 = vmatpush1.msra.mxu0 0.0
        %1445 = vmatprep.subr.mxu0 0.0
        %1446 = vmatpush1.msra.mxu0 0.0
        %1447 = vmatprep.subr.mxu0 0.0
        %1448 = vmatpush1.msra.mxu0 0.0
        %1449 = vmatprep.subr.mxu0 0.0
        %1450 = vmatpush1.msra.mxu0 0.0
        %1451 = vmatprep.subr.mxu0 0.0
        %1452 = vmatpush1.msra.mxu0 0.0
        %1453 = vmatprep.mubr.f32.mxu0 0.0
        %1454 = vmatmul.mubr.f32.gmra.mrb[0].mxu0 %v1383
        %v1455 = vpop.f32.mrb[0].mxu0
        %v1456 = vadd.f32 0.0, %v1455
        %v1457 = vpop.f32.mrb[0].mxu0
        %1458 = vmatprep.mubr.f32.mxu0 0.0
        %1459 = vmatmul.mubr.f32.gmra.mrb[0].mxu0 %v1385
        %v1460 = vpop.f32.mrb[0].mxu0
        %v1461 = vadd.f32 0.0, %v1460
        %v1462 = vpop.f32.mrb[0].mxu0
        %1463 = vmatprep.mubr.f32.mxu0 0.0
        %1464 = vmatmul.mubr.f32.gmra.mrb[0].mxu0 %v1387
        %v1465 = vpop.f32.mrb[0].mxu0
        %v1466 = vadd.f32 0.0, %v1465
        %v1467 = vpop.f32.mrb[0].mxu0
        %1468 = vdwg.mxu0
        %v1469 = vadd.f32 %v1365, %v1456
        %v1470 = vadd.f32 %v1370, %v1461
        %v1471 = vadd.f32 %v1375, %v1466
        %v1472 = vrot.slane %v1194, 3
        %v1473 = vrot.slane %v1195, 3
        %v1474 = vsel %vm785, %v1472, %v1473
        %v1475 = vrot.slane %v1196, 3
        %v1476 = vsel %vm785, %v1473, %v1475
        %v1477 = vsel %vm1205, %v1474, 0
        %v1479 = vsel %vm1205, %v1476, 0
        %v1481 = vsel %vm1205, %v1475, 0
        %1483 = vmatprep.subr.mxu0 0.0
        %1484 = vmatpush1.msra.mxu0 %v311
        %1485 = vmatprep.subr.mxu0 0.0
        %1486 = vmatpush1.msra.mxu0 %v312
        %1487 = vmatprep.subr.mxu0 0.0
        %1488 = vmatpush1.msra.mxu0 %v313
        %1489 = vmatprep.subr.mxu0 0.0
        %1490 = vmatpush1.msra.mxu0 %v314
        %1491 = vmatprep.subr.mxu0 0.0
        %1492 = vmatpush1.msra.mxu0 %v315
        %1493 = vmatprep.subr.mxu0 0.0
        %1494 = vmatpush1.msra.mxu0 %v316
        %1495 = vmatprep.subr.mxu0 0.0
        %1496 = vmatpush1.msra.mxu0 %v317
        %1497 = vmatprep.subr.mxu0 0.0
        %1498 = vmatpush1.msra.mxu0 %v318
        %1499 = vmatprep.subr.mxu0 0.0
        %1500 = vmatpush1.msra.mxu0 0.0
        %1501 = vmatprep.subr.mxu0 0.0
        %1502 = vmatpush1.msra.mxu0 0.0
        %1503 = vmatprep.subr.mxu0 0.0
        %1504 = vmatpush1.msra.mxu0 0.0
        %1505 = vmatprep.subr.mxu0 0.0
        %1506 = vmatpush1.msra.mxu0 0.0
        %1507 = vmatprep.subr.mxu0 0.0
        %1508 = vmatpush1.msra.mxu0 0.0
        %1509 = vmatprep.subr.mxu0 0.0
        %1510 = vmatpush1.msra.mxu0 0.0
        %1511 = vmatprep.subr.mxu0 0.0
        %1512 = vmatpush1.msra.mxu0 0.0
        %1513 = vmatprep.subr.mxu0 0.0
        %1514 = vmatpush1.msra.mxu0 0.0
        %1515 = vmatprep.subr.mxu0 0.0
        %1516 = vmatpush1.msra.mxu0 0.0
        %1517 = vmatprep.subr.mxu0 0.0
        %1518 = vmatpush1.msra.mxu0 0.0
        %1519 = vmatprep.subr.mxu0 0.0
        %1520 = vmatpush1.msra.mxu0 0.0
        %1521 = vmatprep.subr.mxu0 0.0
        %1522 = vmatpush1.msra.mxu0 0.0
        %1523 = vmatprep.subr.mxu0 0.0
        %1524 = vmatpush1.msra.mxu0 0.0
        %1525 = vmatprep.subr.mxu0 0.0
        %1526 = vmatpush1.msra.mxu0 0.0
        %1527 = vmatprep.subr.mxu0 0.0
        %1528 = vmatpush1.msra.mxu0 0.0
        %1529 = vmatprep.subr.mxu0 0.0
        %1530 = vmatpush1.msra.mxu0 0.0
        %1531 = vmatprep.subr.mxu0 0.0
        %1532 = vmatpush1.msra.mxu0 0.0
        %1533 = vmatprep.subr.mxu0 0.0
        %1534 = vmatpush1.msra.mxu0 0.0
        %1535 = vmatprep.subr.mxu0 0.0
        %1536 = vmatpush1.msra.mxu0 0.0
        %1537 = vmatprep.subr.mxu0 0.0
        %1538 = vmatpush1.msra.mxu0 0.0
        %1539 = vmatprep.subr.mxu0 0.0
        %1540 = vmatpush1.msra.mxu0 0.0
        %1541 = vmatprep.subr.mxu0 0.0
        %1542 = vmatpush1.msra.mxu0 0.0
        %1543 = vmatprep.subr.mxu0 0.0
        %1544 = vmatpush1.msra.mxu0 0.0
        %1545 = vmatprep.subr.mxu0 0.0
        %1546 = vmatpush1.msra.mxu0 0.0
        %1547 = vmatprep.mubr.f32.mxu0 0.0
        %1548 = vmatmul.mubr.f32.gmra.mrb[0].mxu0 %v1477
        %v1549 = vpop.f32.mrb[0].mxu0
        %v1550 = vadd.f32 0.0, %v1549
        %v1551 = vpop.f32.mrb[0].mxu0
        %1552 = vmatprep.mubr.f32.mxu0 0.0
        %1553 = vmatmul.mubr.f32.gmra.mrb[0].mxu0 %v1479
        %v1554 = vpop.f32.mrb[0].mxu0
        %v1555 = vadd.f32 0.0, %v1554
        %v1556 = vpop.f32.mrb[0].mxu0
        %1557 = vmatprep.mubr.f32.mxu0 0.0
        %1558 = vmatmul.mubr.f32.gmra.mrb[0].mxu0 %v1481
        %v1559 = vpop.f32.mrb[0].mxu0
        %v1560 = vadd.f32 0.0, %v1559
        %v1561 = vpop.f32.mrb[0].mxu0
        %1562 = vdwg.mxu0
        %v1563 = vadd.f32 %v1469, %v1550
        %v1564 = vadd.f32 %v1470, %v1555
        %v1565 = vadd.f32 %v1471, %v1560
        %v1566 = vrot.slane %v1194, 4
        %v1567 = vrot.slane %v1195, 4
        %v1568 = vsel %vm665, %v1566, %v1567
        %v1569 = vrot.slane %v1196, 4
        %v1570 = vsel %vm665, %v1567, %v1569
        %v1571 = vsel %vm1205, %v1568, 0
        %v1573 = vsel %vm1205, %v1570, 0
        %v1575 = vsel %vm1205, %v1569, 0
        %1577 = vmatprep.subr.mxu0 0.0
        %1578 = vmatpush1.msra.mxu0 %v319
        %1579 = vmatprep.subr.mxu0 0.0
        %1580 = vmatpush1.msra.mxu0 %v320
        %1581 = vmatprep.subr.mxu0 0.0
        %1582 = vmatpush1.msra.mxu0 %v321
        %1583 = vmatprep.subr.mxu0 0.0
        %1584 = vmatpush1.msra.mxu0 %v322
        %1585 = vmatprep.subr.mxu0 0.0
        %1586 = vmatpush1.msra.mxu0 %v323
        %1587 = vmatprep.subr.mxu0 0.0
        %1588 = vmatpush1.msra.mxu0 %v324
        %1589 = vmatprep.subr.mxu0 0.0
        %1590 = vmatpush1.msra.mxu0 %v325
        %1591 = vmatprep.subr.mxu0 0.0
        %1592 = vmatpush1.msra.mxu0 %v326
        %1593 = vmatprep.subr.mxu0 0.0
        %1594 = vmatpush1.msra.mxu0 0.0
        %1595 = vmatprep.subr.mxu0 0.0
        %1596 = vmatpush1.msra.mxu0 0.0
        %1597 = vmatprep.subr.mxu0 0.0
        %1598 = vmatpush1.msra.mxu0 0.0
        %1599 = vmatprep.subr.mxu0 0.0
        %1600 = vmatpush1.msra.mxu0 0.0
        %1601 = vmatprep.subr.mxu0 0.0
        %1602 = vmatpush1.msra.mxu0 0.0
        %1603 = vmatprep.subr.mxu0 0.0
        %1604 = vmatpush1.msra.mxu0 0.0
        %1605 = vmatprep.subr.mxu0 0.0
        %1606 = vmatpush1.msra.mxu0 0.0
        %1607 = vmatprep.subr.mxu0 0.0
        %1608 = vmatpush1.msra.mxu0 0.0
        %1609 = vmatprep.subr.mxu0 0.0
        %1610 = vmatpush1.msra.mxu0 0.0
        %1611 = vmatprep.subr.mxu0 0.0
        %1612 = vmatpush1.msra.mxu0 0.0
        %1613 = vmatprep.subr.mxu0 0.0
        %1614 = vmatpush1.msra.mxu0 0.0
        %1615 = vmatprep.subr.mxu0 0.0
        %1616 = vmatpush1.msra.mxu0 0.0
        %1617 = vmatprep.subr.mxu0 0.0
        %1618 = vmatpush1.msra.mxu0 0.0
        %1619 = vmatprep.subr.mxu0 0.0
        %1620 = vmatpush1.msra.mxu0 0.0
        %1621 = vmatprep.subr.mxu0 0.0
        %1622 = vmatpush1.msra.mxu0 0.0
        %1623 = vmatprep.subr.mxu0 0.0
        %1624 = vmatpush1.msra.mxu0 0.0
        %1625 = vmatprep.subr.mxu0 0.0
        %1626 = vmatpush1.msra.mxu0 0.0
        %1627 = vmatprep.subr.mxu0 0.0
        %1628 = vmatpush1.msra.mxu0 0.0
        %1629 = vmatprep.subr.mxu0 0.0
        %1630 = vmatpush1.msra.mxu0 0.0
        %1631 = vmatprep.subr.mxu0 0.0
        %1632 = vmatpush1.msra.mxu0 0.0
        %1633 = vmatprep.subr.mxu0 0.0
        %1634 = vmatpush1.msra.mxu0 0.0
        %1635 = vmatprep.subr.mxu0 0.0
        %1636 = vmatpush1.msra.mxu0 0.0
        %1637 = vmatprep.subr.mxu0 0.0
        %1638 = vmatpush1.msra.mxu0 0.0
        %1639 = vmatprep.subr.mxu0 0.0
        %1640 = vmatpush1.msra.mxu0 0.0
        %1641 = vmatprep.mubr.f32.mxu0 0.0
        %1642 = vmatmul.mubr.f32.gmra.mrb[0].mxu0 %v1571
        %v1643 = vpop.f32.mrb[0].mxu0
        %v1644 = vadd.f32 0.0, %v1643
        %v1645 = vpop.f32.mrb[0].mxu0
        %1646 = vmatprep.mubr.f32.mxu0 0.0
        %1647 = vmatmul.mubr.f32.gmra.mrb[0].mxu0 %v1573
        %v1648 = vpop.f32.mrb[0].mxu0
        %v1649 = vadd.f32 0.0, %v1648
        %v1650 = vpop.f32.mrb[0].mxu0
        %1651 = vmatprep.mubr.f32.mxu0 0.0
        %1652 = vmatmul.mubr.f32.gmra.mrb[0].mxu0 %v1575
        %v1653 = vpop.f32.mrb[0].mxu0
        %v1654 = vadd.f32 0.0, %v1653
        %v1655 = vpop.f32.mrb[0].mxu0
        %1656 = vdwg.mxu0
        %v1657 = vadd.f32 %v1563, %v1644
        %v1658 = vadd.f32 %v1564, %v1649
        %v1659 = vadd.f32 %v1565, %v1654
        %v1660 = vlaneseq
        %v1661 = vshrl.u32 %v1660, 7
        %v1662 = vsub.s32 1, %v1661
        %v1663 = vrot.slane %v351, %v1662
        %v1664 = vadd.f32 %v1657, %v1663
        %v1665 = vadd.f32 %v1658, %v1663
        %v1666 = vadd.f32 %v1659, %v1663
        %v1670 = vrot.slane %v1664, 1
        %v1671 = vrot.slane %v1665, 1
        %v1672 = vsel %vm415, %v1670, %v1671
        %v1673 = vrot.slane %v1666, 1
        %v1674 = vsel %vm415, %v1671, %v1673
        %v1678 = vmax.f32 %v1664, %v1672
        %v1679 = vmax.f32 %v1665, %v1674
        %v1680 = vmax.f32 %v1666, %v1673
        %vm1681 = vcmask 146432
        %v1682 = vsel %vm1681, %v1098, 0
        %v1684 = vsel %vm1681, %v1099, 0
        %v1687 = vsel %vm429, %v1680, 0
        %1689 = vmatprep.subr.mxu0 0.0
        %1690 = vmatpush1.msra.mxu0 %v1678
        %1691 = vmatprep.subr.mxu0 0.0
        %1692 = vmatpush1.msra.mxu0 %v1679
        %1693 = vmatprep.subr.mxu0 0.0
        %1694 = vmatpush1.msra.mxu0 %v1687
        %1695 = vmatprep.subr.mxu0 0.0
        %1696 = vmatpush1.msra.mxu0 0.0
        %1697 = vmatprep.subr.mxu0 0.0
        %1698 = vmatpush1.msra.mxu0 0.0
        %1699 = vmatprep.subr.mxu0 0.0
        %1700 = vmatpush1.msra.mxu0 0.0
        %1701 = vmatprep.subr.mxu0 0.0
        %1702 = vmatpush1.msra.mxu0 0.0
        %1703 = vmatprep.subr.mxu0 0.0
        %1704 = vmatpush1.msra.mxu0 0.0
        %1705 = vmatprep.subr.mxu0 0.0
        %1706 = vmatpush1.msra.mxu0 0.0
        %1707 = vmatprep.subr.mxu0 0.0
        %1708 = vmatpush1.msra.mxu0 0.0
        %1709 = vmatprep.subr.mxu0 0.0
        %1710 = vmatpush1.msra.mxu0 0.0
        %1711 = vmatprep.subr.mxu0 0.0
        %1712 = vmatpush1.msra.mxu0 0.0
        %1713 = vmatprep.subr.mxu0 0.0
        %1714 = vmatpush1.msra.mxu0 0.0
        %1715 = vmatprep.subr.mxu0 0.0
        %1716 = vmatpush1.msra.mxu0 0.0
        %1717 = vmatprep.subr.mxu0 0.0
        %1718 = vmatpush1.msra.mxu0 0.0
        %1719 = vmatprep.subr.mxu0 0.0
        %1720 = vmatpush1.msra.mxu0 0.0
        %1721 = vmatprep.subr.mxu0 0.0
        %1722 = vmatpush1.msra.mxu0 0.0
        %1723 = vmatprep.subr.mxu0 0.0
        %1724 = vmatpush1.msra.mxu0 0.0
        %1725 = vmatprep.subr.mxu0 0.0
        %1726 = vmatpush1.msra.mxu0 0.0
        %1727 = vmatprep.subr.mxu0 0.0
        %1728 = vmatpush1.msra.mxu0 0.0
        %1729 = vmatprep.subr.mxu0 0.0
        %1730 = vmatpush1.msra.mxu0 0.0
        %1731 = vmatprep.subr.mxu0 0.0
        %1732 = vmatpush1.msra.mxu0 0.0
        %1733 = vmatprep.subr.mxu0 0.0
        %1734 = vmatpush1.msra.mxu0 0.0
        %1735 = vmatprep.subr.mxu0 0.0
        %1736 = vmatpush1.msra.mxu0 0.0
        %1737 = vmatprep.subr.mxu0 0.0
        %1738 = vmatpush1.msra.mxu0 0.0
        %1739 = vmatprep.subr.mxu0 0.0
        %1740 = vmatpush1.msra.mxu0 0.0
        %1741 = vmatprep.subr.mxu0 0.0
        %1742 = vmatpush1.msra.mxu0 0.0
        %1743 = vmatprep.subr.mxu0 0.0
        %1744 = vmatpush1.msra.mxu0 0.0
        %1745 = vmatprep.subr.mxu0 0.0
        %1746 = vmatpush1.msra.mxu0 0.0
        %1747 = vmatprep.subr.mxu0 0.0
        %1748 = vmatpush1.msra.mxu0 0.0
        %1749 = vmatprep.subr.mxu0 0.0
        %1750 = vmatpush1.msra.mxu0 0.0
        %1751 = vmatprep.subr.mxu0 0.0
        %1752 = vmatpush1.msra.mxu0 0.0
        %1753 = vmatprep.mubr.f32.mxu0 0.0
        %1754 = vmatmul.mubr.f32.gmra.mrb[0].mxu0 %v1682
        %v1755 = vpop.f32.mrb[0].mxu0
        %v1756 = vadd.f32 0.0, %v1755
        %v1757 = vpop.f32.mrb[0].mxu0
        %1758 = vmatprep.mubr.f32.mxu0 0.0
        %1759 = vmatmul.mubr.f32.gmra.mrb[0].mxu0 %v1684
        %v1760 = vpop.f32.mrb[0].mxu0
        %v1761 = vadd.f32 0.0, %v1760
        %v1762 = vpop.f32.mrb[0].mxu0
        %1763 = vdwg.mxu0
        %v1764 = vmax.f32 %v1756, 0.0
        %v1765 = vmax.f32 %v1761, 0.0
        %v1767 = vrot.slane %v1764, 1
        %v1768 = vsel %vm1205, %v1767, 0
        %1770 = vmatprep.subr.mxu0 0.0
        %1771 = vmatpush1.msra.mxu0 %v335
        %1772 = vmatprep.subr.mxu0 0.0
        %1773 = vmatpush1.msra.mxu0 %v336
        %1774 = vmatprep.subr.mxu0 0.0
        %1775 = vmatpush1.msra.mxu0 %v337
        %1776 = vmatprep.subr.mxu0 0.0
        %1777 = vmatpush1.msra.mxu0 %v338
        %1778 = vmatprep.subr.mxu0 0.0
        %1779 = vmatpush1.msra.mxu0 %v339
        %1780 = vmatprep.subr.mxu0 0.0
        %1781 = vmatpush1.msra.mxu0 %v340
        %1782 = vmatprep.subr.mxu0 0.0
        %1783 = vmatpush1.msra.mxu0 %v341
        %1784 = vmatprep.subr.mxu0 0.0
        %1785 = vmatpush1.msra.mxu0 %v342
        %1786 = vmatprep.subr.mxu0 0.0
        %1787 = vmatpush1.msra.mxu0 0.0
        %1788 = vmatprep.subr.mxu0 0.0
        %1789 = vmatpush1.msra.mxu0 0.0
        %1790 = vmatprep.subr.mxu0 0.0
        %1791 = vmatpush1.msra.mxu0 0.0
        %1792 = vmatprep.subr.mxu0 0.0
        %1793 = vmatpush1.msra.mxu0 0.0
        %1794 = vmatprep.subr.mxu0 0.0
        %1795 = vmatpush1.msra.mxu0 0.0
        %1796 = vmatprep.subr.mxu0 0.0
        %1797 = vmatpush1.msra.mxu0 0.0
        %1798 = vmatprep.subr.mxu0 0.0
        %1799 = vmatpush1.msra.mxu0 0.0
        %1800 = vmatprep.subr.mxu0 0.0
        %1801 = vmatpush1.msra.mxu0 0.0
        %1802 = vmatprep.subr.mxu0 0.0
        %1803 = vmatpush1.msra.mxu0 0.0
        %1804 = vmatprep.subr.mxu0 0.0
        %1805 = vmatpush1.msra.mxu0 0.0
        %1806 = vmatprep.subr.mxu0 0.0
        %1807 = vmatpush1.msra.mxu0 0.0
        %1808 = vmatprep.subr.mxu0 0.0
        %1809 = vmatpush1.msra.mxu0 0.0
        %1810 = vmatprep.subr.mxu0 0.0
        %1811 = vmatpush1.msra.mxu0 0.0
        %1812 = vmatprep.subr.mxu0 0.0
        %1813 = vmatpush1.msra.mxu0 0.0
        %1814 = vmatprep.subr.mxu0 0.0
        %1815 = vmatpush1.msra.mxu0 0.0
        %1816 = vmatprep.subr.mxu0 0.0
        %1817 = vmatpush1.msra.mxu0 0.0
        %1818 = vmatprep.subr.mxu0 0.0
        %1819 = vmatpush1.msra.mxu0 0.0
        %1820 = vmatprep.subr.mxu0 0.0
        %1821 = vmatpush1.msra.mxu0 0.0
        %1822 = vmatprep.subr.mxu0 0.0
        %1823 = vmatpush1.msra.mxu0 0.0
        %1824 = vmatprep.subr.mxu0 0.0
        %1825 = vmatpush1.msra.mxu0 0.0
        %1826 = vmatprep.subr.mxu0 0.0
        %1827 = vmatpush1.msra.mxu0 0.0
        %1828 = vmatprep.subr.mxu0 0.0
        %1829 = vmatpush1.msra.mxu0 0.0
        %1830 = vmatprep.subr.mxu0 0.0
        %1831 = vmatpush1.msra.mxu0 0.0
        %1832 = vmatprep.subr.mxu0 0.0
        %1833 = vmatpush1.msra.mxu0 0.0
        %1834 = vmatprep.mubr.f32.mxu0 0.0
        %1835 = vmatmul.mubr.f32.gmra.mrb[0].mxu0 %v1768
        %v1836 = vpop.f32.mrb[0].mxu0
        %v1837 = vadd.f32 0.0, %v1836
        %v1838 = vpop.f32.mrb[0].mxu0
        %1839 = vdwg.mxu0
        %v1840 = vsel %vm1205, %v1764, 0
        %1842 = vmatprep.subr.mxu0 0.0
        %1843 = vmatpush1.msra.mxu0 %v327
        %1844 = vmatprep.subr.mxu0 0.0
        %1845 = vmatpush1.msra.mxu0 %v328
        %1846 = vmatprep.subr.mxu0 0.0
        %1847 = vmatpush1.msra.mxu0 %v329
        %1848 = vmatprep.subr.mxu0 0.0
        %1849 = vmatpush1.msra.mxu0 %v330
        %1850 = vmatprep.subr.mxu0 0.0
        %1851 = vmatpush1.msra.mxu0 %v331
        %1852 = vmatprep.subr.mxu0 0.0
        %1853 = vmatpush1.msra.mxu0 %v332
        %1854 = vmatprep.subr.mxu0 0.0
        %1855 = vmatpush1.msra.mxu0 %v333
        %1856 = vmatprep.subr.mxu0 0.0
        %1857 = vmatpush1.msra.mxu0 %v334
        %1858 = vmatprep.subr.mxu0 0.0
        %1859 = vmatpush1.msra.mxu0 0.0
        %1860 = vmatprep.subr.mxu0 0.0
        %1861 = vmatpush1.msra.mxu0 0.0
        %1862 = vmatprep.subr.mxu0 0.0
        %1863 = vmatpush1.msra.mxu0 0.0
        %1864 = vmatprep.subr.mxu0 0.0
        %1865 = vmatpush1.msra.mxu0 0.0
        %1866 = vmatprep.subr.mxu0 0.0
        %1867 = vmatpush1.msra.mxu0 0.0
        %1868 = vmatprep.subr.mxu0 0.0
        %1869 = vmatpush1.msra.mxu0 0.0
        %1870 = vmatprep.subr.mxu0 0.0
        %1871 = vmatpush1.msra.mxu0 0.0
        %1872 = vmatprep.subr.mxu0 0.0
        %1873 = vmatpush1.msra.mxu0 0.0
        %1874 = vmatprep.subr.mxu0 0.0
        %1875 = vmatpush1.msra.mxu0 0.0
        %1876 = vmatprep.subr.mxu0 0.0
        %1877 = vmatpush1.msra.mxu0 0.0
        %1878 = vmatprep.subr.mxu0 0.0
        %1879 = vmatpush1.msra.mxu0 0.0
        %1880 = vmatprep.subr.mxu0 0.0
        %1881 = vmatpush1.msra.mxu0 0.0
        %1882 = vmatprep.subr.mxu0 0.0
        %1883 = vmatpush1.msra.mxu0 0.0
        %1884 = vmatprep.subr.mxu0 0.0
        %1885 = vmatpush1.msra.mxu0 0.0
        %1886 = vmatprep.subr.mxu0 0.0
        %1887 = vmatpush1.msra.mxu0 0.0
        %1888 = vmatprep.subr.mxu0 0.0
        %1889 = vmatpush1.msra.mxu0 0.0
        %1890 = vmatprep.subr.mxu0 0.0
        %1891 = vmatpush1.msra.mxu0 0.0
        %1892 = vmatprep.subr.mxu0 0.0
        %1893 = vmatpush1.msra.mxu0 0.0
        %1894 = vmatprep.subr.mxu0 0.0
        %1895 = vmatpush1.msra.mxu0 0.0
        %1896 = vmatprep.subr.mxu0 0.0
        %1897 = vmatpush1.msra.mxu0 0.0
        %1898 = vmatprep.subr.mxu0 0.0
        %1899 = vmatpush1.msra.mxu0 0.0
        %1900 = vmatprep.subr.mxu0 0.0
        %1901 = vmatpush1.msra.mxu0 0.0
        %1902 = vmatprep.subr.mxu0 0.0
        %1903 = vmatpush1.msra.mxu0 0.0
        %1904 = vmatprep.subr.mxu0 0.0
        %1905 = vmatpush1.msra.mxu0 0.0
        %1906 = vmatprep.mubr.f32.mxu0 0.0
        %1907 = vmatmul.mubr.f32.gmra.mrb[0].mxu0 %v1840
        %v1908 = vpop.f32.mrb[0].mxu0
        %v1909 = vadd.f32 %v1837, %v1908
        %v1910 = vpop.f32.mrb[0].mxu0
        %1911 = vdwg.mxu0
        %v1913 = vrot.slane %v1764, 2
        %v1914 = vrot.slane %v1765, 2
        %v1915 = vsel %vm446, %v1913, %v1914
        %v1916 = vsel %vm1205, %v1915, 0
        %1918 = vmatprep.subr.mxu0 0.0
        %1919 = vmatpush1.msra.mxu0 %v343
        %1920 = vmatprep.subr.mxu0 0.0
        %1921 = vmatpush1.msra.mxu0 %v344
        %1922 = vmatprep.subr.mxu0 0.0
        %1923 = vmatpush1.msra.mxu0 %v345
        %1924 = vmatprep.subr.mxu0 0.0
        %1925 = vmatpush1.msra.mxu0 %v346
        %1926 = vmatprep.subr.mxu0 0.0
        %1927 = vmatpush1.msra.mxu0 %v347
        %1928 = vmatprep.subr.mxu0 0.0
        %1929 = vmatpush1.msra.mxu0 %v348
        %1930 = vmatprep.subr.mxu0 0.0
        %1931 = vmatpush1.msra.mxu0 %v349
        %1932 = vmatprep.subr.mxu0 0.0
        %1933 = vmatpush1.msra.mxu0 %v350
        %1934 = vmatprep.subr.mxu0 0.0
        %1935 = vmatpush1.msra.mxu0 0.0
        %1936 = vmatprep.subr.mxu0 0.0
        %1937 = vmatpush1.msra.mxu0 0.0
        %1938 = vmatprep.subr.mxu0 0.0
        %1939 = vmatpush1.msra.mxu0 0.0
        %1940 = vmatprep.subr.mxu0 0.0
        %1941 = vmatpush1.msra.mxu0 0.0
        %1942 = vmatprep.subr.mxu0 0.0
        %1943 = vmatpush1.msra.mxu0 0.0
        %1944 = vmatprep.subr.mxu0 0.0
        %1945 = vmatpush1.msra.mxu0 0.0
        %1946 = vmatprep.subr.mxu0 0.0
        %1947 = vmatpush1.msra.mxu0 0.0
        %1948 = vmatprep.subr.mxu0 0.0
        %1949 = vmatpush1.msra.mxu0 0.0
        %1950 = vmatprep.subr.mxu0 0.0
        %1951 = vmatpush1.msra.mxu0 0.0
        %1952 = vmatprep.subr.mxu0 0.0
        %1953 = vmatpush1.msra.mxu0 0.0
        %1954 = vmatprep.subr.mxu0 0.0
        %1955 = vmatpush1.msra.mxu0 0.0
        %1956 = vmatprep.subr.mxu0 0.0
        %1957 = vmatpush1.msra.mxu0 0.0
        %1958 = vmatprep.subr.mxu0 0.0
        %1959 = vmatpush1.msra.mxu0 0.0
        %1960 = vmatprep.subr.mxu0 0.0
        %1961 = vmatpush1.msra.mxu0 0.0
        %1962 = vmatprep.subr.mxu0 0.0
        %1963 = vmatpush1.msra.mxu0 0.0
        %1964 = vmatprep.subr.mxu0 0.0
        %1965 = vmatpush1.msra.mxu0 0.0
        %1966 = vmatprep.subr.mxu0 0.0
        %1967 = vmatpush1.msra.mxu0 0.0
        %1968 = vmatprep.subr.mxu0 0.0
        %1969 = vmatpush1.msra.mxu0 0.0
        %1970 = vmatprep.subr.mxu0 0.0
        %1971 = vmatpush1.msra.mxu0 0.0
        %1972 = vmatprep.subr.mxu0 0.0
        %1973 = vmatpush1.msra.mxu0 0.0
        %1974 = vmatprep.subr.mxu0 0.0
        %1975 = vmatpush1.msra.mxu0 0.0
        %1976 = vmatprep.subr.mxu0 0.0
        %1977 = vmatpush1.msra.mxu0 0.0
        %1978 = vmatprep.subr.mxu0 0.0
        %1979 = vmatpush1.msra.mxu0 0.0
        %1980 = vmatprep.subr.mxu0 0.0
        %1981 = vmatpush1.msra.mxu0 0.0
        %1982 = vmatprep.mubr.f32.mxu0 0.0
        %1983 = vmatmul.mubr.f32.gmra.mrb[0].mxu0 %v1916
        %v1984 = vpop.f32.mrb[0].mxu0
        %v1985 = vadd.f32 0.0, %v1984
        %v1986 = vpop.f32.mrb[0].mxu0
        %1987 = vdwg.mxu0
        %v1988 = vadd.f32 %v1909, %v1985
        %v1989 = vlaneseq
        %v1990 = vshrl.u32 %v1989, 7
        %v1991 = vsub.s32 2, %v1990
        %v1992 = vrot.slane %v351, %v1991
        %v1993 = vadd.f32 %v1988, %v1992
        %v1994 = vmax.f32 %v1993, 0.0
        %v1996 = vsel %vm1205, %v1994, 0
        %1998 = vmatprep.subr.mxu0 0.0
        %1999 = vmatpush1.msra.mxu0 %v352
        %2000 = vmatprep.subr.mxu0 0.0
        %2001 = vmatpush1.msra.mxu0 %v353
        %2002 = vmatprep.subr.mxu0 0.0
        %2003 = vmatpush1.msra.mxu0 %v354
        %2004 = vmatprep.subr.mxu0 0.0
        %2005 = vmatpush1.msra.mxu0 %v355
        %2006 = vmatprep.subr.mxu0 0.0
        %2007 = vmatpush1.msra.mxu0 %v356
        %2008 = vmatprep.subr.mxu0 0.0
        %2009 = vmatpush1.msra.mxu0 %v357
        %2010 = vmatprep.subr.mxu0 0.0
        %2011 = vmatpush1.msra.mxu0 %v358
        %2012 = vmatprep.subr.mxu0 0.0
        %2013 = vmatpush1.msra.mxu0 %v359
        %2014 = vmatprep.subr.mxu0 0.0
        %2015 = vmatpush1.msra.mxu0 0.0
        %2016 = vmatprep.subr.mxu0 0.0
        %2017 = vmatpush1.msra.mxu0 0.0
        %2018 = vmatprep.subr.mxu0 0.0
        %2019 = vmatpush1.msra.mxu0 0.0
        %2020 = vmatprep.subr.mxu0 0.0
        %2021 = vmatpush1.msra.mxu0 0.0
        %2022 = vmatprep.subr.mxu0 0.0
        %2023 = vmatpush1.msra.mxu0 0.0
        %2024 = vmatprep.subr.mxu0 0.0
        %2025 = vmatpush1.msra.mxu0 0.0
        %2026 = vmatprep.subr.mxu0 0.0
        %2027 = vmatpush1.msra.mxu0 0.0
        %2028 = vmatprep.subr.mxu0 0.0
        %2029 = vmatpush1.msra.mxu0 0.0
        %2030 = vmatprep.subr.mxu0 0.0
        %2031 = vmatpush1.msra.mxu0 0.0
        %2032 = vmatprep.subr.mxu0 0.0
        %2033 = vmatpush1.msra.mxu0 0.0
        %2034 = vmatprep.subr.mxu0 0.0
        %2035 = vmatpush1.msra.mxu0 0.0
        %2036 = vmatprep.subr.mxu0 0.0
        %2037 = vmatpush1.msra.mxu0 0.0
        %2038 = vmatprep.subr.mxu0 0.0
        %2039 = vmatpush1.msra.mxu0 0.0
        %2040 = vmatprep.subr.mxu0 0.0
        %2041 = vmatpush1.msra.mxu0 0.0
        %2042 = vmatprep.subr.mxu0 0.0
        %2043 = vmatpush1.msra.mxu0 0.0
        %2044 = vmatprep.subr.mxu0 0.0
        %2045 = vmatpush1.msra.mxu0 0.0
        %2046 = vmatprep.subr.mxu0 0.0
        %2047 = vmatpush1.msra.mxu0 0.0
        %2048 = vmatprep.subr.mxu0 0.0
        %2049 = vmatpush1.msra.mxu0 0.0
        %2050 = vmatprep.subr.mxu0 0.0
        %2051 = vmatpush1.msra.mxu0 0.0
        %2052 = vmatprep.subr.mxu0 0.0
        %2053 = vmatpush1.msra.mxu0 0.0
        %2054 = vmatprep.subr.mxu0 0.0
        %2055 = vmatpush1.msra.mxu0 0.0
        %2056 = vmatprep.subr.mxu0 0.0
        %2057 = vmatpush1.msra.mxu0 0.0
        %2058 = vmatprep.subr.mxu0 0.0
        %2059 = vmatpush1.msra.mxu0 0.0
        %2060 = vmatprep.subr.mxu0 0.0
        %2061 = vmatpush1.msra.mxu0 0.0
        %2062 = vmatprep.mubr.f32.mxu0 0.0
        %2063 = vmatmul.mubr.f32.gmra.mrb[0].mxu0 %v1996
        %v2064 = vpop.f32.mrb[0].mxu0
        %v2065 = vadd.f32 0.0, %v2064
        %v2066 = vpop.f32.mrb[0].mxu0
        %2067 = vdwg.mxu0
        %v2068 = vadd.f32 %v408, %v2065
        %v2069 = vrot.slane %v1994, 1
        %v2070 = vsel %vm1205, %v2069, 0
        %2072 = vmatprep.subr.mxu0 0.0
        %2073 = vmatpush1.msra.mxu0 %v360
        %2074 = vmatprep.subr.mxu0 0.0
        %2075 = vmatpush1.msra.mxu0 %v361
        %2076 = vmatprep.subr.mxu0 0.0
        %2077 = vmatpush1.msra.mxu0 %v362
        %2078 = vmatprep.subr.mxu0 0.0
        %2079 = vmatpush1.msra.mxu0 %v363
        %2080 = vmatprep.subr.mxu0 0.0
        %2081 = vmatpush1.msra.mxu0 %v364
        %2082 = vmatprep.subr.mxu0 0.0
        %2083 = vmatpush1.msra.mxu0 %v365
        %2084 = vmatprep.subr.mxu0 0.0
        %2085 = vmatpush1.msra.mxu0 %v366
        %2086 = vmatprep.subr.mxu0 0.0
        %2087 = vmatpush1.msra.mxu0 %v367
        %2088 = vmatprep.subr.mxu0 0.0
        %2089 = vmatpush1.msra.mxu0 0.0
        %2090 = vmatprep.subr.mxu0 0.0
        %2091 = vmatpush1.msra.mxu0 0.0
        %2092 = vmatprep.subr.mxu0 0.0
        %2093 = vmatpush1.msra.mxu0 0.0
        %2094 = vmatprep.subr.mxu0 0.0
        %2095 = vmatpush1.msra.mxu0 0.0
        %2096 = vmatprep.subr.mxu0 0.0
        %2097 = vmatpush1.msra.mxu0 0.0
        %2098 = vmatprep.subr.mxu0 0.0
        %2099 = vmatpush1.msra.mxu0 0.0
        %2100 = vmatprep.subr.mxu0 0.0
        %2101 = vmatpush1.msra.mxu0 0.0
        %2102 = vmatprep.subr.mxu0 0.0
        %2103 = vmatpush1.msra.mxu0 0.0
        %2104 = vmatprep.subr.mxu0 0.0
        %2105 = vmatpush1.msra.mxu0 0.0
        %2106 = vmatprep.subr.mxu0 0.0
        %2107 = vmatpush1.msra.mxu0 0.0
        %2108 = vmatprep.subr.mxu0 0.0
        %2109 = vmatpush1.msra.mxu0 0.0
        %2110 = vmatprep.subr.mxu0 0.0
        %2111 = vmatpush1.msra.mxu0 0.0
        %2112 = vmatprep.subr.mxu0 0.0
        %2113 = vmatpush1.msra.mxu0 0.0
        %2114 = vmatprep.subr.mxu0 0.0
        %2115 = vmatpush1.msra.mxu0 0.0
        %2116 = vmatprep.subr.mxu0 0.0
        %2117 = vmatpush1.msra.mxu0 0.0
        %2118 = vmatprep.subr.mxu0 0.0
        %2119 = vmatpush1.msra.mxu0 0.0
        %2120 = vmatprep.subr.mxu0 0.0
        %2121 = vmatpush1.msra.mxu0 0.0
        %2122 = vmatprep.subr.mxu0 0.0
        %2123 = vmatpush1.msra.mxu0 0.0
        %2124 = vmatprep.subr.mxu0 0.0
        %2125 = vmatpush1.msra.mxu0 0.0
        %2126 = vmatprep.subr.mxu0 0.0
        %2127 = vmatpush1.msra.mxu0 0.0
        %2128 = vmatprep.subr.mxu0 0.0
        %2129 = vmatpush1.msra.mxu0 0.0
        %2130 = vmatprep.subr.mxu0 0.0
        %2131 = vmatpush1.msra.mxu0 0.0
        %2132 = vmatprep.subr.mxu0 0.0
        %2133 = vmatpush1.msra.mxu0 0.0
        %2134 = vmatprep.subr.mxu0 0.0
        %2135 = vmatpush1.msra.mxu0 0.0
        %2136 = vmatprep.mubr.f32.mxu0 0.0
        %2137 = vmatmul.mubr.f32.gmra.mrb[0].mxu0 %v2070
        %v2138 = vpop.f32.mrb[0].mxu0
        %v2139 = vadd.f32 0.0, %v2138
        %v2140 = vpop.f32.mrb[0].mxu0
        %2141 = vdwg.mxu0
        %v2142 = vadd.f32 %v2068, %v2139
        %v2143 = vrot.slane %v1994, 2
        %v2144 = vsel %vm1205, %v2143, 0
        %2146 = vmatprep.subr.mxu0 0.0
        %2147 = vmatpush1.msra.mxu0 %v368
        %2148 = vmatprep.subr.mxu0 0.0
        %2149 = vmatpush1.msra.mxu0 %v369
        %2150 = vmatprep.subr.mxu0 0.0
        %2151 = vmatpush1.msra.mxu0 %v370
        %2152 = vmatprep.subr.mxu0 0.0
        %2153 = vmatpush1.msra.mxu0 %v371
        %2154 = vmatprep.subr.mxu0 0.0
        %2155 = vmatpush1.msra.mxu0 %v372
        %2156 = vmatprep.subr.mxu0 0.0
        %2157 = vmatpush1.msra.mxu0 %v373
        %2158 = vmatprep.subr.mxu0 0.0
        %2159 = vmatpush1.msra.mxu0 %v374
        %2160 = vmatprep.subr.mxu0 0.0
        %2161 = vmatpush1.msra.mxu0 %v375
        %2162 = vmatprep.subr.mxu0 0.0
        %2163 = vmatpush1.msra.mxu0 0.0
        %2164 = vmatprep.subr.mxu0 0.0
        %2165 = vmatpush1.msra.mxu0 0.0
        %2166 = vmatprep.subr.mxu0 0.0
        %2167 = vmatpush1.msra.mxu0 0.0
        %2168 = vmatprep.subr.mxu0 0.0
        %2169 = vmatpush1.msra.mxu0 0.0
        %2170 = vmatprep.subr.mxu0 0.0
        %2171 = vmatpush1.msra.mxu0 0.0
        %2172 = vmatprep.subr.mxu0 0.0
        %2173 = vmatpush1.msra.mxu0 0.0
        %2174 = vmatprep.subr.mxu0 0.0
        %2175 = vmatpush1.msra.mxu0 0.0
        %2176 = vmatprep.subr.mxu0 0.0
        %2177 = vmatpush1.msra.mxu0 0.0
        %2178 = vmatprep.subr.mxu0 0.0
        %2179 = vmatpush1.msra.mxu0 0.0
        %2180 = vmatprep.subr.mxu0 0.0
        %2181 = vmatpush1.msra.mxu0 0.0
        %2182 = vmatprep.subr.mxu0 0.0
        %2183 = vmatpush1.msra.mxu0 0.0
        %2184 = vmatprep.subr.mxu0 0.0
        %2185 = vmatpush1.msra.mxu0 0.0
        %2186 = vmatprep.subr.mxu0 0.0
        %2187 = vmatpush1.msra.mxu0 0.0
        %2188 = vmatprep.subr.mxu0 0.0
        %2189 = vmatpush1.msra.mxu0 0.0
        %2190 = vmatprep.subr.mxu0 0.0
        %2191 = vmatpush1.msra.mxu0 0.0
        %2192 = vmatprep.subr.mxu0 0.0
        %2193 = vmatpush1.msra.mxu0 0.0
        %2194 = vmatprep.subr.mxu0 0.0
        %2195 = vmatpush1.msra.mxu0 0.0
        %2196 = vmatprep.subr.mxu0 0.0
        %2197 = vmatpush1.msra.mxu0 0.0
        %2198 = vmatprep.subr.mxu0 0.0
        %2199 = vmatpush1.msra.mxu0 0.0
        %2200 = vmatprep.subr.mxu0 0.0
        %2201 = vmatpush1.msra.mxu0 0.0
        %2202 = vmatprep.subr.mxu0 0.0
        %2203 = vmatpush1.msra.mxu0 0.0
        %2204 = vmatprep.subr.mxu0 0.0
        %2205 = vmatpush1.msra.mxu0 0.0
        %2206 = vmatprep.subr.mxu0 0.0
        %2207 = vmatpush1.msra.mxu0 0.0
        %2208 = vmatprep.subr.mxu0 0.0
        %2209 = vmatpush1.msra.mxu0 0.0
        %2210 = vmatprep.mubr.f32.mxu0 0.0
        %2211 = vmatmul.mubr.f32.gmra.mrb[0].mxu0 %v2144
        %v2212 = vpop.f32.mrb[0].mxu0
        %v2213 = vadd.f32 0.0, %v2212
        %v2214 = vpop.f32.mrb[0].mxu0
        %2215 = vdwg.mxu0
        %v2216 = vadd.f32 %v2142, %v2213
        %v2217 = vrot.slane %v1994, 3
        %v2218 = vsel %vm1205, %v2217, 0
        %2220 = vmatprep.subr.mxu0 0.0
        %2221 = vmatpush1.msra.mxu0 %v376
        %2222 = vmatprep.subr.mxu0 0.0
        %2223 = vmatpush1.msra.mxu0 %v377
        %2224 = vmatprep.subr.mxu0 0.0
        %2225 = vmatpush1.msra.mxu0 %v378
        %2226 = vmatprep.subr.mxu0 0.0
        %2227 = vmatpush1.msra.mxu0 %v379
        %2228 = vmatprep.subr.mxu0 0.0
        %2229 = vmatpush1.msra.mxu0 %v380
        %2230 = vmatprep.subr.mxu0 0.0
        %2231 = vmatpush1.msra.mxu0 %v381
        %2232 = vmatprep.subr.mxu0 0.0
        %2233 = vmatpush1.msra.mxu0 %v382
        %2234 = vmatprep.subr.mxu0 0.0
        %2235 = vmatpush1.msra.mxu0 %v383
        %2236 = vmatprep.subr.mxu0 0.0
        %2237 = vmatpush1.msra.mxu0 0.0
        %2238 = vmatprep.subr.mxu0 0.0
        %2239 = vmatpush1.msra.mxu0 0.0
        %2240 = vmatprep.subr.mxu0 0.0
        %2241 = vmatpush1.msra.mxu0 0.0
        %2242 = vmatprep.subr.mxu0 0.0
        %2243 = vmatpush1.msra.mxu0 0.0
        %2244 = vmatprep.subr.mxu0 0.0
        %2245 = vmatpush1.msra.mxu0 0.0
        %2246 = vmatprep.subr.mxu0 0.0
        %2247 = vmatpush1.msra.mxu0 0.0
        %2248 = vmatprep.subr.mxu0 0.0
        %2249 = vmatpush1.msra.mxu0 0.0
        %2250 = vmatprep.subr.mxu0 0.0
        %2251 = vmatpush1.msra.mxu0 0.0
        %2252 = vmatprep.subr.mxu0 0.0
        %2253 = vmatpush1.msra.mxu0 0.0
        %2254 = vmatprep.subr.mxu0 0.0
        %2255 = vmatpush1.msra.mxu0 0.0
        %2256 = vmatprep.subr.mxu0 0.0
        %2257 = vmatpush1.msra.mxu0 0.0
        %2258 = vmatprep.subr.mxu0 0.0
        %2259 = vmatpush1.msra.mxu0 0.0
        %2260 = vmatprep.subr.mxu0 0.0
        %2261 = vmatpush1.msra.mxu0 0.0
        %2262 = vmatprep.subr.mxu0 0.0
        %2263 = vmatpush1.msra.mxu0 0.0
        %2264 = vmatprep.subr.mxu0 0.0
        %2265 = vmatpush1.msra.mxu0 0.0
        %2266 = vmatprep.subr.mxu0 0.0
        %2267 = vmatpush1.msra.mxu0 0.0
        %2268 = vmatprep.subr.mxu0 0.0
        %2269 = vmatpush1.msra.mxu0 0.0
        %2270 = vmatprep.subr.mxu0 0.0
        %2271 = vmatpush1.msra.mxu0 0.0
        %2272 = vmatprep.subr.mxu0 0.0
        %2273 = vmatpush1.msra.mxu0 0.0
        %2274 = vmatprep.subr.mxu0 0.0
        %2275 = vmatpush1.msra.mxu0 0.0
        %2276 = vmatprep.subr.mxu0 0.0
        %2277 = vmatpush1.msra.mxu0 0.0
        %2278 = vmatprep.subr.mxu0 0.0
        %2279 = vmatpush1.msra.mxu0 0.0
        %2280 = vmatprep.subr.mxu0 0.0
        %2281 = vmatpush1.msra.mxu0 0.0
        %2282 = vmatprep.subr.mxu0 0.0
        %2283 = vmatpush1.msra.mxu0 0.0
        %2284 = vmatprep.mubr.f32.mxu0 0.0
        %2285 = vmatmul.mubr.f32.gmra.mrb[0].mxu0 %v2218
        %v2286 = vpop.f32.mrb[0].mxu0
        %v2287 = vadd.f32 0.0, %v2286
        %v2288 = vpop.f32.mrb[0].mxu0
        %2289 = vdwg.mxu0
        %v2290 = vadd.f32 %v2216, %v2287
        %v2291 = vrot.slane %v1994, 4
        %v2292 = vsel %vm1205, %v2291, 0
        %2294 = vmatprep.subr.mxu0 0.0
        %2295 = vmatpush1.msra.mxu0 %v384
        %2296 = vmatprep.subr.mxu0 0.0
        %2297 = vmatpush1.msra.mxu0 %v385
        %2298 = vmatprep.subr.mxu0 0.0
        %2299 = vmatpush1.msra.mxu0 %v386
        %2300 = vmatprep.subr.mxu0 0.0
        %2301 = vmatpush1.msra.mxu0 %v387
        %2302 = vmatprep.subr.mxu0 0.0
        %2303 = vmatpush1.msra.mxu0 %v388
        %2304 = vmatprep.subr.mxu0 0.0
        %2305 = vmatpush1.msra.mxu0 %v389
        %2306 = vmatprep.subr.mxu0 0.0
        %2307 = vmatpush1.msra.mxu0 %v390
        %2308 = vmatprep.subr.mxu0 0.0
        %2309 = vmatpush1.msra.mxu0 %v391
        %2310 = vmatprep.subr.mxu0 0.0
        %2311 = vmatpush1.msra.mxu0 0.0
        %2312 = vmatprep.subr.mxu0 0.0
        %2313 = vmatpush1.msra.mxu0 0.0
        %2314 = vmatprep.subr.mxu0 0.0
        %2315 = vmatpush1.msra.mxu0 0.0
        %2316 = vmatprep.subr.mxu0 0.0
        %2317 = vmatpush1.msra.mxu0 0.0
        %2318 = vmatprep.subr.mxu0 0.0
        %2319 = vmatpush1.msra.mxu0 0.0
        %2320 = vmatprep.subr.mxu0 0.0
        %2321 = vmatpush1.msra.mxu0 0.0
        %2322 = vmatprep.subr.mxu0 0.0
        %2323 = vmatpush1.msra.mxu0 0.0
        %2324 = vmatprep.subr.mxu0 0.0
        %2325 = vmatpush1.msra.mxu0 0.0
        %2326 = vmatprep.subr.mxu0 0.0
        %2327 = vmatpush1.msra.mxu0 0.0
        %2328 = vmatprep.subr.mxu0 0.0
        %2329 = vmatpush1.msra.mxu0 0.0
        %2330 = vmatprep.subr.mxu0 0.0
        %2331 = vmatpush1.msra.mxu0 0.0
        %2332 = vmatprep.subr.mxu0 0.0
        %2333 = vmatpush1.msra.mxu0 0.0
        %2334 = vmatprep.subr.mxu0 0.0
        %2335 = vmatpush1.msra.mxu0 0.0
        %2336 = vmatprep.subr.mxu0 0.0
        %2337 = vmatpush1.msra.mxu0 0.0
        %2338 = vmatprep.subr.mxu0 0.0
        %2339 = vmatpush1.msra.mxu0 0.0
        %2340 = vmatprep.subr.mxu0 0.0
        %2341 = vmatpush1.msra.mxu0 0.0
        %2342 = vmatprep.subr.mxu0 0.0
        %2343 = vmatpush1.msra.mxu0 0.0
        %2344 = vmatprep.subr.mxu0 0.0
        %2345 = vmatpush1.msra.mxu0 0.0
        %2346 = vmatprep.subr.mxu0 0.0
        %2347 = vmatpush1.msra.mxu0 0.0
        %2348 = vmatprep.subr.mxu0 0.0
        %2349 = vmatpush1.msra.mxu0 0.0
        %2350 = vmatprep.subr.mxu0 0.0
        %2351 = vmatpush1.msra.mxu0 0.0
        %2352 = vmatprep.subr.mxu0 0.0
        %2353 = vmatpush1.msra.mxu0 0.0
        %2354 = vmatprep.subr.mxu0 0.0
        %2355 = vmatpush1.msra.mxu0 0.0
        %2356 = vmatprep.subr.mxu0 0.0
        %2357 = vmatpush1.msra.mxu0 0.0
        %2358 = vmatprep.mubr.f32.mxu0 0.0
        %2359 = vmatmul.mubr.f32.gmra.mrb[0].mxu0 %v2292
        %v2360 = vpop.f32.mrb[0].mxu0
        %v2361 = vadd.f32 0.0, %v2360
        %v2362 = vpop.f32.mrb[0].mxu0
        %2363 = vdwg.mxu0
        %v2364 = vadd.f32 %v2290, %v2361
        %v2365 = vrot.slane %v1994, 5
        %v2366 = vsel %vm1205, %v2365, 0
        %2368 = vmatprep.subr.mxu0 0.0
        %2369 = vmatpush1.msra.mxu0 %v392
        %2370 = vmatprep.subr.mxu0 0.0
        %2371 = vmatpush1.msra.mxu0 %v393
        %2372 = vmatprep.subr.mxu0 0.0
        %2373 = vmatpush1.msra.mxu0 %v394
        %2374 = vmatprep.subr.mxu0 0.0
        %2375 = vmatpush1.msra.mxu0 %v395
        %2376 = vmatprep.subr.mxu0 0.0
        %2377 = vmatpush1.msra.mxu0 %v396
        %2378 = vmatprep.subr.mxu0 0.0
        %2379 = vmatpush1.msra.mxu0 %v397
        %2380 = vmatprep.subr.mxu0 0.0
        %2381 = vmatpush1.msra.mxu0 %v398
        %2382 = vmatprep.subr.mxu0 0.0
        %2383 = vmatpush1.msra.mxu0 %v399
        %2384 = vmatprep.subr.mxu0 0.0
        %2385 = vmatpush1.msra.mxu0 0.0
        %2386 = vmatprep.subr.mxu0 0.0
        %2387 = vmatpush1.msra.mxu0 0.0
        %2388 = vmatprep.subr.mxu0 0.0
        %2389 = vmatpush1.msra.mxu0 0.0
        %2390 = vmatprep.subr.mxu0 0.0
        %2391 = vmatpush1.msra.mxu0 0.0
        %2392 = vmatprep.subr.mxu0 0.0
        %2393 = vmatpush1.msra.mxu0 0.0
        %2394 = vmatprep.subr.mxu0 0.0
        %2395 = vmatpush1.msra.mxu0 0.0
        %2396 = vmatprep.subr.mxu0 0.0
        %2397 = vmatpush1.msra.mxu0 0.0
        %2398 = vmatprep.subr.mxu0 0.0
        %2399 = vmatpush1.msra.mxu0 0.0
        %2400 = vmatprep.subr.mxu0 0.0
        %2401 = vmatpush1.msra.mxu0 0.0
        %2402 = vmatprep.subr.mxu0 0.0
        %2403 = vmatpush1.msra.mxu0 0.0
        %2404 = vmatprep.subr.mxu0 0.0
        %2405 = vmatpush1.msra.mxu0 0.0
        %2406 = vmatprep.subr.mxu0 0.0
        %2407 = vmatpush1.msra.mxu0 0.0
        %2408 = vmatprep.subr.mxu0 0.0
        %2409 = vmatpush1.msra.mxu0 0.0
        %2410 = vmatprep.subr.mxu0 0.0
        %2411 = vmatpush1.msra.mxu0 0.0
        %2412 = vmatprep.subr.mxu0 0.0
        %2413 = vmatpush1.msra.mxu0 0.0
        %2414 = vmatprep.subr.mxu0 0.0
        %2415 = vmatpush1.msra.mxu0 0.0
        %2416 = vmatprep.subr.mxu0 0.0
        %2417 = vmatpush1.msra.mxu0 0.0
        %2418 = vmatprep.subr.mxu0 0.0
        %2419 = vmatpush1.msra.mxu0 0.0
        %2420 = vmatprep.subr.mxu0 0.0
        %2421 = vmatpush1.msra.mxu0 0.0
        %2422 = vmatprep.subr.mxu0 0.0
        %2423 = vmatpush1.msra.mxu0 0.0
        %2424 = vmatprep.subr.mxu0 0.0
        %2425 = vmatpush1.msra.mxu0 0.0
        %2426 = vmatprep.subr.mxu0 0.0
        %2427 = vmatpush1.msra.mxu0 0.0
        %2428 = vmatprep.subr.mxu0 0.0
        %2429 = vmatpush1.msra.mxu0 0.0
        %2430 = vmatprep.subr.mxu0 0.0
        %2431 = vmatpush1.msra.mxu0 0.0
        %2432 = vmatprep.mubr.f32.mxu0 0.0
        %2433 = vmatmul.mubr.f32.gmra.mrb[0].mxu0 %v2366
        %v2434 = vpop.f32.mrb[0].mxu0
        %v2435 = vadd.f32 0.0, %v2434
        %v2436 = vpop.f32.mrb[0].mxu0
        %2437 = vdwg.mxu0
        %v2438 = vadd.f32 %v2364, %v2435
        %v2439 = vrot.slane %v1994, 6
        %v2440 = vsel %vm1205, %v2439, 0
        %2442 = vmatprep.subr.mxu0 0.0
        %2443 = vmatpush1.msra.mxu0 %v400
        %2444 = vmatprep.subr.mxu0 0.0
        %2445 = vmatpush1.msra.mxu0 %v401
        %2446 = vmatprep.subr.mxu0 0.0
        %2447 = vmatpush1.msra.mxu0 %v402
        %2448 = vmatprep.subr.mxu0 0.0
        %2449 = vmatpush1.msra.mxu0 %v403
        %2450 = vmatprep.subr.mxu0 0.0
        %2451 = vmatpush1.msra.mxu0 %v404
        %2452 = vmatprep.subr.mxu0 0.0
        %2453 = vmatpush1.msra.mxu0 %v405
        %2454 = vmatprep.subr.mxu0 0.0
        %2455 = vmatpush1.msra.mxu0 %v406
        %2456 = vmatprep.subr.mxu0 0.0
        %2457 = vmatpush1.msra.mxu0 %v407
        %2458 = vmatprep.subr.mxu0 0.0
        %2459 = vmatpush1.msra.mxu0 0.0
        %2460 = vmatprep.subr.mxu0 0.0
        %2461 = vmatpush1.msra.mxu0 0.0
        %2462 = vmatprep.subr.mxu0 0.0
        %2463 = vmatpush1.msra.mxu0 0.0
        %2464 = vmatprep.subr.mxu0 0.0
        %2465 = vmatpush1.msra.mxu0 0.0
        %2466 = vmatprep.subr.mxu0 0.0
        %2467 = vmatpush1.msra.mxu0 0.0
        %2468 = vmatprep.subr.mxu0 0.0
        %2469 = vmatpush1.msra.mxu0 0.0
        %2470 = vmatprep.subr.mxu0 0.0
        %2471 = vmatpush1.msra.mxu0 0.0
        %2472 = vmatprep.subr.mxu0 0.0
        %2473 = vmatpush1.msra.mxu0 0.0
        %2474 = vmatprep.subr.mxu0 0.0
        %2475 = vmatpush1.msra.mxu0 0.0
        %2476 = vmatprep.subr.mxu0 0.0
        %2477 = vmatpush1.msra.mxu0 0.0
        %2478 = vmatprep.subr.mxu0 0.0
        %2479 = vmatpush1.msra.mxu0 0.0
        %2480 = vmatprep.subr.mxu0 0.0
        %2481 = vmatpush1.msra.mxu0 0.0
        %2482 = vmatprep.subr.mxu0 0.0
        %2483 = vmatpush1.msra.mxu0 0.0
        %2484 = vmatprep.subr.mxu0 0.0
        %2485 = vmatpush1.msra.mxu0 0.0
        %2486 = vmatprep.subr.mxu0 0.0
        %2487 = vmatpush1.msra.mxu0 0.0
        %2488 = vmatprep.subr.mxu0 0.0
        %2489 = vmatpush1.msra.mxu0 0.0
        %2490 = vmatprep.subr.mxu0 0.0
        %2491 = vmatpush1.msra.mxu0 0.0
        %2492 = vmatprep.subr.mxu0 0.0
        %2493 = vmatpush1.msra.mxu0 0.0
        %2494 = vmatprep.subr.mxu0 0.0
        %2495 = vmatpush1.msra.mxu0 0.0
        %2496 = vmatprep.subr.mxu0 0.0
        %2497 = vmatpush1.msra.mxu0 0.0
        %2498 = vmatprep.subr.mxu0 0.0
        %2499 = vmatpush1.msra.mxu0 0.0
        %2500 = vmatprep.subr.mxu0 0.0
        %2501 = vmatpush1.msra.mxu0 0.0
        %2502 = vmatprep.subr.mxu0 0.0
        %2503 = vmatpush1.msra.mxu0 0.0
        %2504 = vmatprep.subr.mxu0 0.0
        %2505 = vmatpush1.msra.mxu0 0.0
        %2506 = vmatprep.mubr.f32.mxu0 0.0
        %2507 = vmatmul.mubr.f32.gmra.mrb[0].mxu0 %v2440
        %v2508 = vpop.f32.mrb[0].mxu0
        %v2509 = vadd.f32 0.0, %v2508
        %v2510 = vpop.f32.mrb[0].mxu0
        %2511 = vdwg.mxu0
        %v2512 = vadd.f32 %v2438, %v2509
        %2513 = vst [vmem:[%s270] sm:$0x1] %v2512
        %s2514 = sand.u32 %s181, 1
        %s2515 = scalar_lea.sflag [#allocation3], %s2514
        %s2516 = sand.u32 %s181, 1
        %s2517 = scalar_lea.vmem [#allocation2], %s2516
        // Predicated region
        $region49: #{cnn_base_forward.1} parent=47 // pred_check
          %p2518 = pneg %p191
        $region50: #{cnn_base_forward.1} parent=47 // pred_check_branch
          %2520 = sbr.rel (%p2518) target = $region52
        $region51: #{cnn_base_forward.1} parent=47 // pred_region
          %s2522 = ssub.s32 16, 16
          %2523 = vsyncadd %s2515, %s2522
          %s2524 = smul.addr %s21, 16
          %s2525 = scalar_lea.hbm %s7, %s2524
          %s2527 = sshll.u32 %s2517, 4
          %s2528 = int_to_ptr.vmem [resolvable:$true] %s2527
          %2530 = dma.vmem_to_hbm [thread:$0]  %s2528, 16, %s2525, %s2515
        $region52: #{cnn_base_forward.1} parent=47 // pred_fallthru
          _
      $region48: #{cnn_base_forward.1} parent=5 // pred_fallthru
        _
      %p2531 = scmp.le.s32.totalorder 2, %s16
      // Predicated region
      $region53: #{cnn_base_forward.1} parent=5 // pred_check
        %p2532 = pneg %p2531
      $region54: #{cnn_base_forward.1} parent=5 // pred_check_branch
        %2534 = sbr.rel (%p2532) target = $region56
      $region55: #{cnn_base_forward.1} parent=5 // pred_region
        %s2535 = ssub.s32 %s16, 2
        // Predicated region
        $region57: #{cnn_base_forward.1} parent=55 // pred_check
          %p2536 = pneg %p197
        $region58: #{cnn_base_forward.1} parent=55 // pred_check_branch
          %2538 = sbr.rel (%p2536) target = $region60
        $region59: #{cnn_base_forward.1} parent=55 // pred_region
          %s2539 = sand.u32 %s182, 1
          %s2540 = scalar_lea.sflag [#allocation3], %s2539
          %s2541 = sand.u32 %s182, 1
          %s2542 = scalar_lea.vmem [#allocation2], %s2541
          %2543 = dma.done %s2540, 16
        $region60: #{cnn_base_forward.1} parent=55 // pred_fallthru
          _
      $region56: #{cnn_base_forward.1} parent=5 // pred_fallthru
        _
    $region6: #{cnn_base_forward.1} parent=1 // loop_footer
      %s20 = sadd.s32 1, %s16
    $region7: #{cnn_base_forward.1} parent=1 // loop_footer_branch
      %15 = sbr.rel target = $region3
    $region8: #{cnn_base_forward.1} parent=1 // loop_exit
      _
    %2544 = vsyncpa [#allocation3], 1
    %s2545 = scalar_lea.sflag [#allocation3], 1
    %2546 = vsyncpa %s2545, 1

</llo_original>
